<compile_context>
chip_gen: v6e
topology: v6e:2x2x1
jax: 0.10.0
libtpu: 0.0.40
codegen_flags: <defaults>
</compile_context>

<pallas_src>
import functools

import jax
import jax.numpy as jnp
from jax.experimental import pallas as pl
from jax.experimental.pallas import tpu as pltpu

INPUT_DIM = 79       # logical input features (PyTorch module default)
PAD_IN = 128         # padded to a full lane tile
HID1 = 16            # out_dim_lin
HID2 = 1024
HID3 = 512


def _round_up(x, m):
    return (x + m - 1) // m * m


def mlp_kernel(x_ref, w1_ref, b1_ref, w2_ref, b2_ref, w3_ref, b3_ref, o_ref):
    # fc1 + ReLU   (dropout = identity in eval mode)
    x = x_ref[...]
    h = jnp.dot(x.astype(jnp.bfloat16), w1_ref[...],
                preferred_element_type=jnp.float32)
    h = jnp.maximum(h + b1_ref[...], 0.0)
    # fc2 + ReLU
    h = jnp.dot(h.astype(jnp.bfloat16), w2_ref[...],
                preferred_element_type=jnp.float32)
    h = jnp.maximum(h + b2_ref[...], 0.0)
    # fc3 + ReLU   (>96% of FLOPs; lane-dense 512-wide output)
    h = jnp.dot(h.astype(jnp.bfloat16), w3_ref[...],
                preferred_element_type=jnp.float32)
    h = jnp.maximum(h + b3_ref[...], 0.0)
    # forward() returns this activation; the final self.out projection is unused.
    o_ref[...] = h.astype(o_ref.dtype)


def _choose_tile(batch, block_b):
    """Batch tile: multiple of 8, <= block_b, and >= 2 grid steps when possible."""
    tb = _round_up(min(max(block_b, 8), _round_up(batch, 8)), 8)
    # Prefer >= 2 grid steps so v7x's two TensorCores both get work
    # (dimension_semantics=("parallel",) shards the batch grid axis).
    if _round_up(batch, tb) // tb == 1 and tb > 8:
        tb = _round_up((tb + 1) // 2, 8)
    padded_b = _round_up(batch, tb)
    return tb, padded_b


def _vmem_budget_bytes(tb, out_itemsize):
    """Per-block working set + headroom; capped for v7x's 64 MiB per-TC VMEM."""
    weights = ((PAD_IN * HID1 + HID1 * HID2 + HID2 * HID3) * 2   # bf16, single-buffered
               + (HID1 + HID2 + HID3) * 4)                        # f32 biases
    io = 2 * tb * PAD_IN * 4 + 2 * tb * HID3 * out_itemsize       # double-buffered x / out
    interm = (tb * HID1 * (4 + 2)                                 # fc1 f32 + bf16 copy
              + tb * HID2 * (4 + 2)                               # fc2 f32 + bf16 copy (spilled)
              + tb * HID3 * 4)                                    # fc3 f32
    need = weights + io + interm
    return int(min(max(need + (12 << 20), 32 << 20), 48 << 20))


@functools.partial(jax.jit, static_argnames=("block_b", "out_dtype"))
def mlp_forward(x, params, *, block_b=1024, out_dtype=jnp.float32):
    """x: (B, INPUT_DIM) float32. Returns (B, HID3) in out_dtype (default f32)."""
    w1, b1, w2, b2, w3, b3 = params
    B, in_dim = x.shape

    # Zero-pad the feature dim to a full 128-lane tile (w1 is already padded).
    if in_dim < PAD_IN:
        x = jnp.pad(x, ((0, 0), (0, PAD_IN - in_dim)))

    tb, padded_b = _choose_tile(B, block_b)
    if padded_b != B:
        x = jnp.pad(x, ((0, padded_b - B), (0, 0)))
    grid = (padded_b // tb,)

    def pinned(shape):
        # Same block every grid step -> stays VMEM-resident (no re-DMA);
        # Buffered(1) suppresses the useless second buffer copy.
        return pl.BlockSpec(shape, lambda i: tuple(0 for _ in shape),
                            pipeline_mode=pl.Buffered(1))

    out = pl.pallas_call(
        mlp_kernel,
        out_shape=jax.ShapeDtypeStruct((padded_b, HID3), out_dtype),
        grid_spec=pltpu.PrefetchScalarGridSpec(
            num_scalar_prefetch=0,
            grid=grid,
            in_specs=[
                pl.BlockSpec((tb, PAD_IN), lambda i: (i, 0)),
                pinned(w1.shape), pinned(b1.shape),
                pinned(w2.shape), pinned(b2.shape),
                pinned(w3.shape), pinned(b3.shape),
            ],
            out_specs=pl.BlockSpec((tb, HID3), lambda i: (i, 0)),
        ),
        compiler_params=pltpu.CompilerParams(
            dimension_semantics=("parallel",),   # megacore batch sharding on v7x
            vmem_limit_bytes=_vmem_budget_bytes(tb, jnp.dtype(out_dtype).itemsize),
        ),
    )(x, w1, b1, w2, b2, w3, b3)
    return out[:B]


def init_params(key):
    """Deterministic init mimicking nn.Linear's uniform(-1/sqrt(fan_in), ...).

    Weights are stored (in, out) (transpose of PyTorch layout) in bfloat16;
    biases are (1, out) float32. w1 is zero-padded along fan_in to PAD_IN.
    """
    ks = jax.random.split(key, 6)

    def linear(kw, kb, fan_in, fan_out, pad_in=None):
        bound = 1.0 / jnp.sqrt(jnp.float32(fan_in))
        w = jax.random.uniform(kw, (fan_in, fan_out), jnp.float32, -bound, bound)
        if pad_in is not None and pad_in > fan_in:
            w = jnp.pad(w, ((0, pad_in - fan_in), (0, 0)))
        b = jax.random.uniform(kb, (1, fan_out), jnp.float32, -bound, bound)
        return w.astype(jnp.bfloat16), b

    w1, b1 = linear(ks[0], ks[1], INPUT_DIM, HID1, pad_in=PAD_IN)
    w2, b2 = linear(ks[2], ks[3], HID1, HID2)
    w3, b3 = linear(ks[4], ks[5], HID2, HID3)
    return (w1, b1, w2, b2, w3, b3)


def reference_forward(x, params):
    """Pure-JAX reference with the same bf16-input / f32-accumulate math."""
    w1, b1, w2, b2, w3, b3 = params
    x = jnp.pad(x, ((0, 0), (0, PAD_IN - x.shape[1])))

    def layer(h, w, b):
        y = jnp.dot(h.astype(jnp.bfloat16), w, preferred_element_type=jnp.float32)
        return jnp.maximum(y + b, 0.0)

    h = layer(x, w1, b1)
    h = layer(h, w2, b2)
    h = layer(h, w3, b3)
    return h


if __name__ == "__main__":
    key = jax.random.PRNGKey(0)
    k_x, k_p = jax.random.split(key)
    params = init_params(k_p)

    # Small single-block case.
    B1 = 8
    x1 = jax.random.normal(k_x, (B1, INPUT_DIM), dtype=jnp.float32)
    out1 = jax.block_until_ready(mlp_forward(x1, params))
    ref1 = reference_forward(x1, params)
    assert out1.shape == (B1, HID3), out1.shape
    assert jnp.allclose(out1, ref1, atol=2e-2, rtol=2e-2), "mismatch vs reference (B=8)"

    # Slightly larger case that exercises multi-step grid, batch padding and
    # the >=2-grid-step (megacore) tiling path.
    B2 = 24
    x2 = jax.random.normal(jax.random.PRNGKey(1), (B2, INPUT_DIM), dtype=jnp.float32)
    out2 = jax.block_until_ready(mlp_forward(x2, params))
    ref2 = reference_forward(x2, params)
    assert out2.shape == (B2, HID3), out2.shape
    assert jnp.allclose(out2, ref2, atol=2e-2, rtol=2e-2), "mismatch vs reference (B=24)"

    print("KERNEL_OK")
</pallas_src>

<mosaic_0001>
module attributes {stable_mosaic.version = 11 : i64} {
  func.func @mlp_kernel(%arg0: i32, %arg1: memref<8x128xf32, #tpu.memory_space<vmem>>, %arg2: memref<128x16xbf16, #tpu.memory_space<vmem>>, %arg3: memref<1x16xf32, #tpu.memory_space<vmem>>, %arg4: memref<16x1024xbf16, #tpu.memory_space<vmem>>, %arg5: memref<1x1024xf32, #tpu.memory_space<vmem>>, %arg6: memref<1024x512xbf16, #tpu.memory_space<vmem>>, %arg7: memref<1x512xf32, #tpu.memory_space<vmem>>, %arg8: memref<8x512xf32, #tpu.memory_space<vmem>>) attributes {dimension_semantics = [#tpu.dimension_semantics<parallel>], iteration_bounds = array<i64: 1>, scalar_prefetch = 0 : i64, scratch_operands = 0 : i64, tpu.core_type = #tpu.core_type<tc>, window_params = [{transform_indices = @transform_0, window_bounds = array<i64: 8, 128>}, {pipeline_mode = #tpu.pipeline_mode<synchronous>, transform_indices = @transform_1, window_bounds = array<i64: 128, 16>}, {pipeline_mode = #tpu.pipeline_mode<synchronous>, transform_indices = @transform_2, window_bounds = array<i64: 1, 16>}, {pipeline_mode = #tpu.pipeline_mode<synchronous>, transform_indices = @transform_3, window_bounds = array<i64: 16, 1024>}, {pipeline_mode = #tpu.pipeline_mode<synchronous>, transform_indices = @transform_4, window_bounds = array<i64: 1, 1024>}, {pipeline_mode = #tpu.pipeline_mode<synchronous>, transform_indices = @transform_5, window_bounds = array<i64: 1024, 512>}, {pipeline_mode = #tpu.pipeline_mode<synchronous>, transform_indices = @transform_6, window_bounds = array<i64: 1, 512>}, {transform_indices = @transform_7, window_bounds = array<i64: 8, 512>}]} {
    %c0 = arith.constant 0 : index
    %c0_0 = arith.constant 0 : index
    %0 = vector.load %arg1[%c0, %c0_0] : memref<8x128xf32, #tpu.memory_space<vmem>>, vector<8x128xf32>
    %1 = arith.truncf %0 : vector<8x128xf32> to vector<8x128xbf16>
    %c0_1 = arith.constant 0 : index
    %c0_2 = arith.constant 0 : index
    %2 = vector.load %arg2[%c0_1, %c0_2] : memref<128x16xbf16, #tpu.memory_space<vmem>>, vector<128x16xbf16>
    %cst = arith.constant dense<0.000000e+00> : vector<8x16xf32>
    %3 = tpu.matmul %1, %2, %cst {dimension_numbers = #tpu.dot_dimension_numbers<[1], [0], [0], [1], [0, 0, 1, 1], [], []>} : vector<8x128xbf16>, vector<128x16xbf16>, vector<8x16xf32> -> vector<8x16xf32>
    %c0_3 = arith.constant 0 : index
    %c0_4 = arith.constant 0 : index
    %4 = vector.load %arg3[%c0_3, %c0_4] : memref<1x16xf32, #tpu.memory_space<vmem>>, vector<1x16xf32>
    %5 = vector.broadcast %4 : vector<1x16xf32> to vector<8x16xf32>
    %6 = arith.addf %3, %5 : vector<8x16xf32>
    %cst_5 = arith.constant 0.000000e+00 : f32
    %7 = vector.broadcast %cst_5 : f32 to vector<8x16xf32>
    %8 = arith.maximumf %6, %7 : vector<8x16xf32>
    %9 = arith.truncf %8 : vector<8x16xf32> to vector<8x16xbf16>
    %c0_6 = arith.constant 0 : index
    %c0_7 = arith.constant 0 : index
    %10 = vector.load %arg4[%c0_6, %c0_7] : memref<16x1024xbf16, #tpu.memory_space<vmem>>, vector<16x1024xbf16>
    %cst_8 = arith.constant dense<0.000000e+00> : vector<8x1024xf32>
    %11 = tpu.matmul %9, %10, %cst_8 {dimension_numbers = #tpu.dot_dimension_numbers<[1], [0], [0], [1], [0, 0, 1, 1], [], []>} : vector<8x16xbf16>, vector<16x1024xbf16>, vector<8x1024xf32> -> vector<8x1024xf32>
    %c0_9 = arith.constant 0 : index
    %c0_10 = arith.constant 0 : index
    %12 = vector.load %arg5[%c0_9, %c0_10] : memref<1x1024xf32, #tpu.memory_space<vmem>>, vector<1x1024xf32>
    %13 = vector.broadcast %12 : vector<1x1024xf32> to vector<8x1024xf32>
    %14 = arith.addf %11, %13 : vector<8x1024xf32>
    %cst_11 = arith.constant 0.000000e+00 : f32
    %15 = vector.broadcast %cst_11 : f32 to vector<8x1024xf32>
    %16 = arith.maximumf %14, %15 : vector<8x1024xf32>
    %17 = arith.truncf %16 : vector<8x1024xf32> to vector<8x1024xbf16>
    %c0_12 = arith.constant 0 : index
    %c0_13 = arith.constant 0 : index
    %18 = vector.load %arg6[%c0_12, %c0_13] : memref<1024x512xbf16, #tpu.memory_space<vmem>>, vector<1024x512xbf16>
    %cst_14 = arith.constant dense<0.000000e+00> : vector<8x512xf32>
    %19 = tpu.matmul %17, %18, %cst_14 {dimension_numbers = #tpu.dot_dimension_numbers<[1], [0], [0], [1], [0, 0, 1, 1], [], []>} : vector<8x1024xbf16>, vector<1024x512xbf16>, vector<8x512xf32> -> vector<8x512xf32>
    %c0_15 = arith.constant 0 : index
    %c0_16 = arith.constant 0 : index
    %20 = vector.load %arg7[%c0_15, %c0_16] : memref<1x512xf32, #tpu.memory_space<vmem>>, vector<1x512xf32>
    %21 = vector.broadcast %20 : vector<1x512xf32> to vector<8x512xf32>
    %22 = arith.addf %19, %21 : vector<8x512xf32>
    %cst_17 = arith.constant 0.000000e+00 : f32
    %23 = vector.broadcast %cst_17 : f32 to vector<8x512xf32>
    %24 = arith.maximumf %22, %23 : vector<8x512xf32>
    %c0_18 = arith.constant 0 : index
    %c0_19 = arith.constant 0 : index
    %25 = vector.load %arg8[%c0_18, %c0_19] : memref<8x512xf32, #tpu.memory_space<vmem>>, vector<8x512xf32>
    tpu.vector_store %arg8[%c0_18, %c0_19], %24 {strides = array<i32>} : memref<8x512xf32, #tpu.memory_space<vmem>>, vector<8x512xf32>,
    return
  }
  func.func @transform_0(%arg0: i32) -> (i32, i32) {
    %c0_i32 = arith.constant 0 : i32
    %c0_i32_0 = arith.constant 0 : i32
    return %arg0, %c0_i32 : i32, i32
  }
  func.func @transform_1(%arg0: i32) -> (i32, i32) {
    %c0_i32 = arith.constant 0 : i32
    %c0_i32_0 = arith.constant 0 : i32
    %c0_i32_1 = arith.constant 0 : i32
    return %c0_i32, %c0_i32_0 : i32, i32
  }
  func.func @transform_2(%arg0: i32) -> (i32, i32) {
    %c0_i32 = arith.constant 0 : i32
    %c0_i32_0 = arith.constant 0 : i32
    %c0_i32_1 = arith.constant 0 : i32
    return %c0_i32, %c0_i32_0 : i32, i32
  }
  func.func @transform_3(%arg0: i32) -> (i32, i32) {
    %c0_i32 = arith.constant 0 : i32
    %c0_i32_0 = arith.constant 0 : i32
    %c0_i32_1 = arith.constant 0 : i32
    return %c0_i32, %c0_i32_0 : i32, i32
  }
  func.func @transform_4(%arg0: i32) -> (i32, i32) {
    %c0_i32 = arith.constant 0 : i32
    %c0_i32_0 = arith.constant 0 : i32
    %c0_i32_1 = arith.constant 0 : i32
    return %c0_i32, %c0_i32_0 : i32, i32
  }
  func.func @transform_5(%arg0: i32) -> (i32, i32) {
    %c0_i32 = arith.constant 0 : i32
    %c0_i32_0 = arith.constant 0 : i32
    %c0_i32_1 = arith.constant 0 : i32
    return %c0_i32, %c0_i32_0 : i32, i32
  }
  func.func @transform_6(%arg0: i32) -> (i32, i32) {
    %c0_i32 = arith.constant 0 : i32
    %c0_i32_0 = arith.constant 0 : i32
    %c0_i32_1 = arith.constant 0 : i32
    return %c0_i32, %c0_i32_0 : i32, i32
  }
  func.func @transform_7(%arg0: i32) -> (i32, i32) {
    %c0_i32 = arith.constant 0 : i32
    %c0_i32_0 = arith.constant 0 : i32
    return %arg0, %c0_i32 : i32, i32
  }
}

</mosaic_0001>

<llo_original>
// kernel: mlp_forward.1
$region0: #{mlp_forward.1}
  #allocation0 [shape = 'u32[]', space=smem, size = 0x4, offset = 0x4, fixed_abs, tag = 'smem constant byte address 0x4 - core index']
  #allocation1 [shape = 'u32[144,128]{1,0:T(1,128)}', space=vmem, size = 0x12000, scoped, tag = 'internal scratch']
  %s0 = inlined_call_operand.vmem [shape: f32[8,128], index: 0, kind: input, shape index: {}]
  %s1 = inlined_call_operand.vmem [shape: bf16[128,16], index: 1, kind: input, shape index: {}]
  %s2 = inlined_call_operand.vmem [shape: f32[1,16], index: 2, kind: input, shape index: {}]
  %s3 = inlined_call_operand.vmem [shape: bf16[16,1024], index: 3, kind: input, shape index: {}]
  %s4 = inlined_call_operand.vmem [shape: f32[1,1024], index: 4, kind: input, shape index: {}]
  %s5 = inlined_call_operand.hbm [shape: bf16[1024,512], index: 5, kind: input, shape index: {}]
  %s6 = inlined_call_operand.vmem [shape: f32[1,512], index: 6, kind: input, shape index: {}]
  %s7 = inlined_call_operand.hbm [shape: f32[8,512], index: 7, kind: output, shape index: {}]
  %s8 = sld [smem:[#allocation0]]
  $region42: #{mlp_forward.1} parent=0
    _
  %s10 = ssub.s32 1, %s8
  %s11 = scalar_select 0, %s10, %s8
  $region1: #{mlp_forward.1} parent=0
    #allocation2 [shape = 'u8[1048576]{0}', space=vmem, size = 0x100000, scoped, tag = 'input window, operand 5, single buffered']
    #allocation3 [shape = 's32[1]{0}', space=sflag, size = 0x4, scoped, tag = 'scoped memory for mlp_forward.1']
    #allocation4 [shape = 's32[1]{0}', space=sflag, size = 0x4, scoped, tag = 'scoped memory for mlp_forward.1']
    #allocation5 [shape = 'u8[16384]{0}', space=vmem, size = 0x4000, scoped, tag = 'output window, operand 0, single buffered']
    %12 = vsyncpa [#allocation3], 0
    %13 = vsyncpa [#allocation4], 0
    // Predicated region
    $region2: #{mlp_forward.1} parent=1 // pred_check
      _
    $region3: #{mlp_forward.1} parent=1 // pred_check_branch
      %15 = sbr.rel (0) target = $region5
    $region4: #{mlp_forward.1} parent=1 // pred_region
      _
    $region5: #{mlp_forward.1} parent=1 // pred_fallthru
      _
    // Predicated region
    $region6: #{mlp_forward.1} parent=1 // pred_check
      _
    $region7: #{mlp_forward.1} parent=1 // pred_check_branch
      %17 = sbr.rel (0) target = $region9
    $region8: #{mlp_forward.1} parent=1 // pred_region
      _
    $region9: #{mlp_forward.1} parent=1 // pred_fallthru
      _
    // Predicated region
    $region10: #{mlp_forward.1} parent=1 // pred_check
      _
    $region11: #{mlp_forward.1} parent=1 // pred_check_branch
      %19 = sbr.rel (0) target = $region13
    $region12: #{mlp_forward.1} parent=1 // pred_region
      _
    $region13: #{mlp_forward.1} parent=1 // pred_fallthru
      _
    // Predicated region
    $region14: #{mlp_forward.1} parent=1 // pred_check
      _
    $region15: #{mlp_forward.1} parent=1 // pred_check_branch
      %21 = sbr.rel (0) target = $region17
    $region16: #{mlp_forward.1} parent=1 // pred_region
      _
    $region17: #{mlp_forward.1} parent=1 // pred_fallthru
      _
    // Predicated region
    $region18: #{mlp_forward.1} parent=1 // pred_check
      _
    $region19: #{mlp_forward.1} parent=1 // pred_check_branch
      %23 = sbr.rel (0) target = $region21
    $region20: #{mlp_forward.1} parent=1 // pred_region
      _
    $region21: #{mlp_forward.1} parent=1 // pred_fallthru
      _
    // Predicated region
    $region22: #{mlp_forward.1} parent=1 // pred_check
      _
    $region23: #{mlp_forward.1} parent=1 // pred_check_branch
      %25 = sbr.rel (0) target = $region25
    $region24: #{mlp_forward.1} parent=1 // pred_region
      %s27 = ssub.s32 32768, 32768
      %28 = vsyncadd [#allocation3], %s27
      %s29 = sshll.u32 [#allocation2], 4
      %s30 = int_to_ptr.vmem [resolvable:$true] %s29
      %35 = dma.hbm_to_vmem [thread:$0]  %s5, 32768, %s30, [#allocation3], 256, 256, 16
    $region25: #{mlp_forward.1} parent=1 // pred_fallthru
      _
    // Predicated region
    $region26: #{mlp_forward.1} parent=1 // pred_check
      _
    $region27: #{mlp_forward.1} parent=1 // pred_check_branch
      %37 = sbr.rel (0) target = $region29
    $region28: #{mlp_forward.1} parent=1 // pred_region
      _
    $region29: #{mlp_forward.1} parent=1 // pred_fallthru
      _
    // Predicated region
    $region30: #{mlp_forward.1} parent=1 // pred_check
      _
    $region31: #{mlp_forward.1} parent=1 // pred_check_branch
      %39 = sbr.rel (0) target = $region33
    $region32: #{mlp_forward.1} parent=1 // pred_region
      %40 = dma.done [#allocation3], 32768
    $region33: #{mlp_forward.1} parent=1 // pred_fallthru
      _
    %v42 = vld [vmem:[%s0] sm:$0xff]
    %v43 = vpack.c.bf16 %v42, %v42
    %v44 = vld [vmem:[%s1] sm:$0xf]
    %v45 = vld [vmem:[%s1 + $0x4] sm:$0xf]
    %v46 = vld [vmem:[%s1 + $0x8] sm:$0xf]
    %v47 = vld [vmem:[%s1 + $0xc] sm:$0xf]
    %v48 = vld [vmem:[%s1 + $0x10] sm:$0xf]
    %v49 = vld [vmem:[%s1 + $0x14] sm:$0xf]
    %v50 = vld [vmem:[%s1 + $0x18] sm:$0xf]
    %v51 = vld [vmem:[%s1 + $0x1c] sm:$0xf]
    %v52 = vld [vmem:[%s1 + $0x20] sm:$0xf]
    %v53 = vld [vmem:[%s1 + $0x24] sm:$0xf]
    %v54 = vld [vmem:[%s1 + $0x28] sm:$0xf]
    %v55 = vld [vmem:[%s1 + $0x2c] sm:$0xf]
    %v56 = vld [vmem:[%s1 + $0x30] sm:$0xf]
    %v57 = vld [vmem:[%s1 + $0x34] sm:$0xf]
    %v58 = vld [vmem:[%s1 + $0x38] sm:$0xf]
    %v59 = vld [vmem:[%s1 + $0x3c] sm:$0xf]
    %v60 = vld [vmem:[%s2] sm:$0x1]
    %v62 = vlaneseq
    %v63 = vshrl.u32 %v62, 7
    %v64 = vsub.s32 0, %v63
    %v65 = vrot.slane %v60, %v64
    %v83 = vunpack.c.l.b16 %v44
    %v84 = vunpack.c.l.b16 %v45
    %v85 = vunpack.c.l.b16 %v46
    %v86 = vunpack.c.l.b16 %v47
    %v87 = vunpack.c.l.b16 %v48
    %v88 = vunpack.c.l.b16 %v49
    %v89 = vunpack.c.l.b16 %v50
    %v90 = vunpack.c.l.b16 %v51
    %v91 = vunpack.c.l.b16 %v52
    %v92 = vunpack.c.l.b16 %v53
    %v93 = vunpack.c.l.b16 %v54
    %v94 = vunpack.c.l.b16 %v55
    %v95 = vunpack.c.l.b16 %v56
    %v96 = vunpack.c.l.b16 %v57
    %v97 = vunpack.c.l.b16 %v58
    %v98 = vunpack.c.l.b16 %v59
    %v99 = vpack.c.b16 %v84, %v83
    %v100 = vpack.c.b16 %v86, %v85
    %v101 = vpack.c.b16 %v88, %v87
    %v102 = vpack.c.b16 %v90, %v89
    %v103 = vpack.c.b16 %v92, %v91
    %v104 = vpack.c.b16 %v94, %v93
    %v105 = vpack.c.b16 %v96, %v95
    %v106 = vpack.c.b16 %v98, %v97
    %115 = vmatprep.subr.bf16.mxu0 0
    %116 = vmatpush1.bf16.msra.mxu0 %v106
    %117 = vmatprep.subr.bf16.mxu0 0
    %118 = vmatpush1.bf16.msra.mxu0 %v105
    %119 = vmatprep.subr.bf16.mxu0 0
    %120 = vmatpush1.bf16.msra.mxu0 %v104
    %121 = vmatprep.subr.bf16.mxu0 0
    %122 = vmatpush1.bf16.msra.mxu0 %v103
    %123 = vmatprep.subr.bf16.mxu0 0
    %124 = vmatpush1.bf16.msra.mxu0 %v102
    %125 = vmatprep.subr.bf16.mxu0 0
    %126 = vmatpush1.bf16.msra.mxu0 %v101
    %127 = vmatprep.subr.bf16.mxu0 0
    %128 = vmatpush1.bf16.msra.mxu0 %v100
    %129 = vmatprep.subr.bf16.mxu0 0
    %130 = vmatpush1.bf16.msra.mxu0 %v99
    %131 = vmatprep.subr.bf16.mxu0 0
    %132 = vmatpush2.bf16.msra.mxu0 0
    %133 = vmatprep.subr.bf16.mxu0 0
    %134 = vmatpush2.bf16.msra.mxu0 0
    %135 = vmatprep.subr.bf16.mxu0 0
    %136 = vmatpush2.bf16.msra.mxu0 0
    %137 = vmatprep.subr.bf16.mxu0 0
    %138 = vmatpush2.bf16.msra.mxu0 0
    %139 = vmatprep.subr.bf16.mxu0 0
    %140 = vmatpush2.bf16.msra.mxu0 0
    %141 = vmatprep.subr.bf16.mxu0 0
    %142 = vmatpush2.bf16.msra.mxu0 0
    %143 = vmatprep.subr.bf16.mxu0 0
    %144 = vmatpush2.bf16.msra.mxu0 0
    %145 = vmatprep.subr.bf16.mxu0 0
    %146 = vmatpush2.bf16.msra.mxu0 0
    %147 = vmatprep.mubr.bf16.mxu0 0
    %148 = vmatmul.mubr.bf16.gmra.mxu0 %v43
    %v149 = vpop.f32.mrf.mxu0
    %v150 = vadd.f32 %v65, %v149
    %v151 = vpop.f32.mrf.mxu0
    %v152 = vpop.f32.mrf.mxu0
    %v153 = vpop.f32.mrf.mxu0
    %154 = vdwg.mxu0
    %v155 = vmax.f32 %v150, 0.0
    %v156 = vpack.c.bf16 %v155, %v155
    %v157 = vld [vmem:[%s3] sm:$0xff]
    %v158 = vld [vmem:[%s3 + $0x8] sm:$0xff]
    %v159 = vld [vmem:[%s3 + $0x10] sm:$0xff]
    %v160 = vld [vmem:[%s3 + $0x18] sm:$0xff]
    %v161 = vld [vmem:[%s3 + $0x20] sm:$0xff]
    %v162 = vld [vmem:[%s3 + $0x28] sm:$0xff]
    %v163 = vld [vmem:[%s3 + $0x30] sm:$0xff]
    %v164 = vld [vmem:[%s3 + $0x38] sm:$0xff]
    %v165 = vld [vmem:[%s4] sm:$0xff]
    %v167 = vlaneseq
    %v168 = vshrl.u32 %v167, 7
    %v169 = vsub.s32 0, %v168
    %v170 = vrot.slane %v165, %v169
    %v171 = vlaneseq
    %v172 = vshrl.u32 %v171, 7
    %v173 = vsub.s32 1, %v172
    %v174 = vrot.slane %v165, %v173
    %v175 = vlaneseq
    %v176 = vshrl.u32 %v175, 7
    %v177 = vsub.s32 2, %v176
    %v178 = vrot.slane %v165, %v177
    %v179 = vlaneseq
    %v180 = vshrl.u32 %v179, 7
    %v181 = vsub.s32 3, %v180
    %v182 = vrot.slane %v165, %v181
    %v183 = vlaneseq
    %v184 = vshrl.u32 %v183, 7
    %v185 = vsub.s32 4, %v184
    %v186 = vrot.slane %v165, %v185
    %v187 = vlaneseq
    %v188 = vshrl.u32 %v187, 7
    %v189 = vsub.s32 5, %v188
    %v190 = vrot.slane %v165, %v189
    %v191 = vlaneseq
    %v192 = vshrl.u32 %v191, 7
    %v193 = vsub.s32 6, %v192
    %v194 = vrot.slane %v165, %v193
    %v195 = vlaneseq
    %v196 = vshrl.u32 %v195, 7
    %v197 = vsub.s32 7, %v196
    %v198 = vrot.slane %v165, %v197
    %v215 = vunpack.c.l.b16 %v157
    %v216 = vunpack.c.h.b16 %v157
    %v217 = vunpack.c.l.b16 %v158
    %v218 = vunpack.c.h.b16 %v158
    %v219 = vunpack.c.l.b16 %v159
    %v220 = vunpack.c.h.b16 %v159
    %v221 = vunpack.c.l.b16 %v160
    %v222 = vunpack.c.h.b16 %v160
    %v223 = vunpack.c.l.b16 %v161
    %v224 = vunpack.c.h.b16 %v161
    %v225 = vunpack.c.l.b16 %v162
    %v226 = vunpack.c.h.b16 %v162
    %v227 = vunpack.c.l.b16 %v163
    %v228 = vunpack.c.h.b16 %v163
    %v229 = vunpack.c.l.b16 %v164
    %v230 = vunpack.c.h.b16 %v164
    %v231 = vpack.c.b16 %v223, %v215
    %v232 = vpack.c.b16 %v224, %v216
    %v233 = vpack.c.b16 %v225, %v217
    %v234 = vpack.c.b16 %v226, %v218
    %v235 = vpack.c.b16 %v227, %v219
    %v236 = vpack.c.b16 %v228, %v220
    %v237 = vpack.c.b16 %v229, %v221
    %v238 = vpack.c.b16 %v230, %v222
    %vm247 = vcmask 130048
    %v249 = vsel %vm247, %v156, 0
    %251 = vmatprep.subr.bf16.mxu0 0
    %252 = vmatpush1.bf16.msra.mxu0 0
    %253 = vmatprep.subr.bf16.mxu0 0
    %254 = vmatpush1.bf16.msra.mxu0 0
    %255 = vmatprep.subr.bf16.mxu0 0
    %256 = vmatpush1.bf16.msra.mxu0 0
    %257 = vmatprep.subr.bf16.mxu0 0
    %258 = vmatpush1.bf16.msra.mxu0 0
    %259 = vmatprep.subr.bf16.mxu0 0
    %260 = vmatpush1.bf16.msra.mxu0 0
    %261 = vmatprep.subr.bf16.mxu0 0
    %262 = vmatpush1.bf16.msra.mxu0 0
    %263 = vmatprep.subr.bf16.mxu0 0
    %264 = vmatpush1.bf16.msra.mxu0 0
    %265 = vmatprep.subr.bf16.mxu0 %v232
    %266 = vmatpush1.bf16.msra.mxu0 %v231
    %267 = vmatprep.subr.bf16.mxu0 0
    %268 = vmatpush2.bf16.msra.mxu0 0
    %269 = vmatprep.subr.bf16.mxu0 0
    %270 = vmatpush2.bf16.msra.mxu0 0
    %271 = vmatprep.subr.bf16.mxu0 0
    %272 = vmatpush2.bf16.msra.mxu0 0
    %273 = vmatprep.subr.bf16.mxu0 0
    %274 = vmatpush2.bf16.msra.mxu0 0
    %275 = vmatprep.subr.bf16.mxu0 0
    %276 = vmatpush2.bf16.msra.mxu0 0
    %277 = vmatprep.subr.bf16.mxu0 0
    %278 = vmatpush2.bf16.msra.mxu0 0
    %279 = vmatprep.subr.bf16.mxu0 0
    %280 = vmatpush2.bf16.msra.mxu0 0
    %281 = vmatprep.subr.bf16.mxu0 0
    %282 = vmatpush2.bf16.msra.mxu0 0
    %283 = vmatprep.mubr.bf16.mxu0 0
    %284 = vmatmul.mubr.bf16.gmra.mxu0 %v249
    %v285 = vpop.f32.mrf.mxu0
    %v286 = vadd.f32 %v170, %v285
    %v287 = vpop.f32.mrf.mxu0
    %v288 = vadd.f32 %v174, %v287
    %v289 = vpop.f32.mrf.mxu0
    %v290 = vpop.f32.mrf.mxu0
    %291 = vdwg.mxu0
    %292 = vmatprep.subr.bf16.mxu0 0
    %293 = vmatpush1.bf16.msra.mxu0 0
    %294 = vmatprep.subr.bf16.mxu0 0
    %295 = vmatpush1.bf16.msra.mxu0 0
    %296 = vmatprep.subr.bf16.mxu0 0
    %297 = vmatpush1.bf16.msra.mxu0 0
    %298 = vmatprep.subr.bf16.mxu0 0
    %299 = vmatpush1.bf16.msra.mxu0 0
    %300 = vmatprep.subr.bf16.mxu0 0
    %301 = vmatpush1.bf16.msra.mxu0 0
    %302 = vmatprep.subr.bf16.mxu0 0
    %303 = vmatpush1.bf16.msra.mxu0 0
    %304 = vmatprep.subr.bf16.mxu0 0
    %305 = vmatpush1.bf16.msra.mxu0 0
    %306 = vmatprep.subr.bf16.mxu0 %v234
    %307 = vmatpush1.bf16.msra.mxu0 %v233
    %308 = vmatprep.subr.bf16.mxu0 0
    %309 = vmatpush2.bf16.msra.mxu0 0
    %310 = vmatprep.subr.bf16.mxu0 0
    %311 = vmatpush2.bf16.msra.mxu0 0
    %312 = vmatprep.subr.bf16.mxu0 0
    %313 = vmatpush2.bf16.msra.mxu0 0
    %314 = vmatprep.subr.bf16.mxu0 0
    %315 = vmatpush2.bf16.msra.mxu0 0
    %316 = vmatprep.subr.bf16.mxu0 0
    %317 = vmatpush2.bf16.msra.mxu0 0
    %318 = vmatprep.subr.bf16.mxu0 0
    %319 = vmatpush2.bf16.msra.mxu0 0
    %320 = vmatprep.subr.bf16.mxu0 0
    %321 = vmatpush2.bf16.msra.mxu0 0
    %322 = vmatprep.subr.bf16.mxu0 0
    %323 = vmatpush2.bf16.msra.mxu0 0
    %324 = vmatprep.mubr.bf16.mxu0 0
    %325 = vmatmul.mubr.bf16.gmra.mxu0 %v249
    %v326 = vpop.f32.mrf.mxu0
    %v327 = vadd.f32 %v178, %v326
    %v328 = vpop.f32.mrf.mxu0
    %v329 = vadd.f32 %v182, %v328
    %v330 = vpop.f32.mrf.mxu0
    %v331 = vpop.f32.mrf.mxu0
    %332 = vdwg.mxu0
    %333 = vmatprep.subr.bf16.mxu0 0
    %334 = vmatpush1.bf16.msra.mxu0 0
    %335 = vmatprep.subr.bf16.mxu0 0
    %336 = vmatpush1.bf16.msra.mxu0 0
    %337 = vmatprep.subr.bf16.mxu0 0
    %338 = vmatpush1.bf16.msra.mxu0 0
    %339 = vmatprep.subr.bf16.mxu0 0
    %340 = vmatpush1.bf16.msra.mxu0 0
    %341 = vmatprep.subr.bf16.mxu0 0
    %342 = vmatpush1.bf16.msra.mxu0 0
    %343 = vmatprep.subr.bf16.mxu0 0
    %344 = vmatpush1.bf16.msra.mxu0 0
    %345 = vmatprep.subr.bf16.mxu0 0
    %346 = vmatpush1.bf16.msra.mxu0 0
    %347 = vmatprep.subr.bf16.mxu0 %v236
    %348 = vmatpush1.bf16.msra.mxu0 %v235
    %349 = vmatprep.subr.bf16.mxu0 0
    %350 = vmatpush2.bf16.msra.mxu0 0
    %351 = vmatprep.subr.bf16.mxu0 0
    %352 = vmatpush2.bf16.msra.mxu0 0
    %353 = vmatprep.subr.bf16.mxu0 0
    %354 = vmatpush2.bf16.msra.mxu0 0
    %355 = vmatprep.subr.bf16.mxu0 0
    %356 = vmatpush2.bf16.msra.mxu0 0
    %357 = vmatprep.subr.bf16.mxu0 0
    %358 = vmatpush2.bf16.msra.mxu0 0
    %359 = vmatprep.subr.bf16.mxu0 0
    %360 = vmatpush2.bf16.msra.mxu0 0
    %361 = vmatprep.subr.bf16.mxu0 0
    %362 = vmatpush2.bf16.msra.mxu0 0
    %363 = vmatprep.subr.bf16.mxu0 0
    %364 = vmatpush2.bf16.msra.mxu0 0
    %365 = vmatprep.mubr.bf16.mxu0 0
    %366 = vmatmul.mubr.bf16.gmra.mxu0 %v249
    %v367 = vpop.f32.mrf.mxu0
    %v368 = vadd.f32 %v186, %v367
    %v369 = vpop.f32.mrf.mxu0
    %v370 = vadd.f32 %v190, %v369
    %v371 = vpop.f32.mrf.mxu0
    %v372 = vpop.f32.mrf.mxu0
    %373 = vdwg.mxu0
    %374 = vmatprep.subr.bf16.mxu0 0
    %375 = vmatpush1.bf16.msra.mxu0 0
    %376 = vmatprep.subr.bf16.mxu0 0
    %377 = vmatpush1.bf16.msra.mxu0 0
    %378 = vmatprep.subr.bf16.mxu0 0
    %379 = vmatpush1.bf16.msra.mxu0 0
    %380 = vmatprep.subr.bf16.mxu0 0
    %381 = vmatpush1.bf16.msra.mxu0 0
    %382 = vmatprep.subr.bf16.mxu0 0
    %383 = vmatpush1.bf16.msra.mxu0 0
    %384 = vmatprep.subr.bf16.mxu0 0
    %385 = vmatpush1.bf16.msra.mxu0 0
    %386 = vmatprep.subr.bf16.mxu0 0
    %387 = vmatpush1.bf16.msra.mxu0 0
    %388 = vmatprep.subr.bf16.mxu0 %v238
    %389 = vmatpush1.bf16.msra.mxu0 %v237
    %390 = vmatprep.subr.bf16.mxu0 0
    %391 = vmatpush2.bf16.msra.mxu0 0
    %392 = vmatprep.subr.bf16.mxu0 0
    %393 = vmatpush2.bf16.msra.mxu0 0
    %394 = vmatprep.subr.bf16.mxu0 0
    %395 = vmatpush2.bf16.msra.mxu0 0
    %396 = vmatprep.subr.bf16.mxu0 0
    %397 = vmatpush2.bf16.msra.mxu0 0
    %398 = vmatprep.subr.bf16.mxu0 0
    %399 = vmatpush2.bf16.msra.mxu0 0
    %400 = vmatprep.subr.bf16.mxu0 0
    %401 = vmatpush2.bf16.msra.mxu0 0
    %402 = vmatprep.subr.bf16.mxu0 0
    %403 = vmatpush2.bf16.msra.mxu0 0
    %404 = vmatprep.subr.bf16.mxu0 0
    %405 = vmatpush2.bf16.msra.mxu0 0
    %406 = vmatprep.mubr.bf16.mxu0 0
    %407 = vmatmul.mubr.bf16.gmra.mxu0 %v249
    %v408 = vpop.f32.mrf.mxu0
    %v409 = vadd.f32 %v194, %v408
    %v410 = vpop.f32.mrf.mxu0
    %v411 = vadd.f32 %v198, %v410
    %v412 = vpop.f32.mrf.mxu0
    %v413 = vpop.f32.mrf.mxu0
    %414 = vdwg.mxu0
    %v415 = vmax.f32 %v286, 0.0
    %v416 = vmax.f32 %v288, 0.0
    %v417 = vmax.f32 %v327, 0.0
    %v418 = vmax.f32 %v329, 0.0
    %v419 = vmax.f32 %v368, 0.0
    %v420 = vmax.f32 %v370, 0.0
    %v421 = vmax.f32 %v409, 0.0
    %v422 = vmax.f32 %v411, 0.0
    %v423 = vpack.c.bf16 %v415, %v415
    %v424 = vpack.c.bf16 %v416, %v416
    %v425 = vpack.c.bf16 %v417, %v417
    %v426 = vpack.c.bf16 %v418, %v418
    %v427 = vpack.c.bf16 %v419, %v419
    %v428 = vpack.c.bf16 %v420, %v420
    %v429 = vpack.c.bf16 %v421, %v421
    %v430 = vpack.c.bf16 %v422, %v422
    %v431 = vld [vmem:[#allocation2] sm:$0xff]
    %v432 = vld [vmem:[#allocation2 + $0x8] sm:$0xff]
    %v433 = vld [vmem:[#allocation2 + $0x10] sm:$0xff]
    %v434 = vld [vmem:[#allocation2 + $0x18] sm:$0xff]
    %v435 = vld [vmem:[#allocation2 + $0x20] sm:$0xff]
    %v436 = vld [vmem:[#allocation2 + $0x28] sm:$0xff]
    %v437 = vld [vmem:[#allocation2 + $0x30] sm:$0xff]
    %v438 = vld [vmem:[#allocation2 + $0x38] sm:$0xff]
    %v439 = vld [vmem:[#allocation2 + $0x40] sm:$0xff]
    %v440 = vld [vmem:[#allocation2 + $0x48] sm:$0xff]
    %v441 = vld [vmem:[#allocation2 + $0x50] sm:$0xff]
    %v442 = vld [vmem:[#allocation2 + $0x58] sm:$0xff]
    %v443 = vld [vmem:[#allocation2 + $0x60] sm:$0xff]
    %v444 = vld [vmem:[#allocation2 + $0x68] sm:$0xff]
    %v445 = vld [vmem:[#allocation2 + $0x70] sm:$0xff]
    %v446 = vld [vmem:[#allocation2 + $0x78] sm:$0xff]
    %v447 = vld [vmem:[#allocation2 + $0x80] sm:$0xff]
    %v448 = vld [vmem:[#allocation2 + $0x88] sm:$0xff]
    %v449 = vld [vmem:[#allocation2 + $0x90] sm:$0xff]
    %v450 = vld [vmem:[#allocation2 + $0x98] sm:$0xff]
    %v451 = vld [vmem:[#allocation2 + $0xa0] sm:$0xff]
    %v452 = vld [vmem:[#allocation2 + $0xa8] sm:$0xff]
    %v453 = vld [vmem:[#allocation2 + $0xb0] sm:$0xff]
    %v454 = vld [vmem:[#allocation2 + $0xb8] sm:$0xff]
    %v455 = vld [vmem:[#allocation2 + $0xc0] sm:$0xff]
    %v456 = vld [vmem:[#allocation2 + $0xc8] sm:$0xff]
    %v457 = vld [vmem:[#allocation2 + $0xd0] sm:$0xff]
    %v458 = vld [vmem:[#allocation2 + $0xd8] sm:$0xff]
    %v459 = vld [vmem:[#allocation2 + $0xe0] sm:$0xff]
    %v460 = vld [vmem:[#allocation2 + $0xe8] sm:$0xff]
    %v461 = vld [vmem:[#allocation2 + $0xf0] sm:$0xff]
    %v462 = vld [vmem:[#allocation2 + $0xf8] sm:$0xff]
    %v463 = vld [vmem:[#allocation2 + $0x100] sm:$0xff]
    %v464 = vld [vmem:[#allocation2 + $0x108] sm:$0xff]
    %v465 = vld [vmem:[#allocation2 + $0x110] sm:$0xff]
    %v466 = vld [vmem:[#allocation2 + $0x118] sm:$0xff]
    %v467 = vld [vmem:[#allocation2 + $0x120] sm:$0xff]
    %v468 = vld [vmem:[#allocation2 + $0x128] sm:$0xff]
    %v469 = vld [vmem:[#allocation2 + $0x130] sm:$0xff]
    %v470 = vld [vmem:[#allocation2 + $0x138] sm:$0xff]
    %v471 = vld [vmem:[#allocation2 + $0x140] sm:$0xff]
    %v472 = vld [vmem:[#allocation2 + $0x148] sm:$0xff]
    %v473 = vld [vmem:[#allocation2 + $0x150] sm:$0xff]
    %v474 = vld [vmem:[#allocation2 + $0x158] sm:$0xff]
    %v475 = vld [vmem:[#allocation2 + $0x160] sm:$0xff]
    %v476 = vld [vmem:[#allocation2 + $0x168] sm:$0xff]
    %v477 = vld [vmem:[#allocation2 + $0x170] sm:$0xff]
    %v478 = vld [vmem:[#allocation2 + $0x178] sm:$0xff]
    %v479 = vld [vmem:[#allocation2 + $0x180] sm:$0xff]
    %v480 = vld [vmem:[#allocation2 + $0x188] sm:$0xff]
    %v481 = vld [vmem:[#allocation2 + $0x190] sm:$0xff]
    %v482 = vld [vmem:[#allocation2 + $0x198] sm:$0xff]
    %v483 = vld [vmem:[#allocation2 + $0x1a0] sm:$0xff]
    %v484 = vld [vmem:[#allocation2 + $0x1a8] sm:$0xff]
    %v485 = vld [vmem:[#allocation2 + $0x1b0] sm:$0xff]
    %v486 = vld [vmem:[#allocation2 + $0x1b8] sm:$0xff]
    %v487 = vld [vmem:[#allocation2 + $0x1c0] sm:$0xff]
    %v488 = vld [vmem:[#allocation2 + $0x1c8] sm:$0xff]
    %v489 = vld [vmem:[#allocation2 + $0x1d0] sm:$0xff]
    %v490 = vld [vmem:[#allocation2 + $0x1d8] sm:$0xff]
    %v491 = vld [vmem:[#allocation2 + $0x1e0] sm:$0xff]
    %v492 = vld [vmem:[#allocation2 + $0x1e8] sm:$0xff]
    %v493 = vld [vmem:[#allocation2 + $0x1f0] sm:$0xff]
    %v494 = vld [vmem:[#allocation2 + $0x1f8] sm:$0xff]
    %v495 = vld [vmem:[#allocation2 + $0x200] sm:$0xff]
    %v496 = vld [vmem:[#allocation2 + $0x208] sm:$0xff]
    %v497 = vld [vmem:[#allocation2 + $0x210] sm:$0xff]
    %v498 = vld [vmem:[#allocation2 + $0x218] sm:$0xff]
    %v499 = vld [vmem:[#allocation2 + $0x220] sm:$0xff]
    %v500 = vld [vmem:[#allocation2 + $0x228] sm:$0xff]
    %v501 = vld [vmem:[#allocation2 + $0x230] sm:$0xff]
    %v502 = vld [vmem:[#allocation2 + $0x238] sm:$0xff]
    %v503 = vld [vmem:[#allocation2 + $0x240] sm:$0xff]
    %v504 = vld [vmem:[#allocation2 + $0x248] sm:$0xff]
    %v505 = vld [vmem:[#allocation2 + $0x250] sm:$0xff]
    %v506 = vld [vmem:[#allocation2 + $0x258] sm:$0xff]
    %v507 = vld [vmem:[#allocation2 + $0x260] sm:$0xff]
    %v508 = vld [vmem:[#allocation2 + $0x268] sm:$0xff]
    %v509 = vld [vmem:[#allocation2 + $0x270] sm:$0xff]
    %v510 = vld [vmem:[#allocation2 + $0x278] sm:$0xff]
    %v511 = vld [vmem:[#allocation2 + $0x280] sm:$0xff]
    %v512 = vld [vmem:[#allocation2 + $0x288] sm:$0xff]
    %v513 = vld [vmem:[#allocation2 + $0x290] sm:$0xff]
    %v514 = vld [vmem:[#allocation2 + $0x298] sm:$0xff]
    %v515 = vld [vmem:[#allocation2 + $0x2a0] sm:$0xff]
    %v516 = vld [vmem:[#allocation2 + $0x2a8] sm:$0xff]
    %v517 = vld [vmem:[#allocation2 + $0x2b0] sm:$0xff]
    %v518 = vld [vmem:[#allocation2 + $0x2b8] sm:$0xff]
    %v519 = vld [vmem:[#allocation2 + $0x2c0] sm:$0xff]
    %v520 = vld [vmem:[#allocation2 + $0x2c8] sm:$0xff]
    %v521 = vld [vmem:[#allocation2 + $0x2d0] sm:$0xff]
    %v522 = vld [vmem:[#allocation2 + $0x2d8] sm:$0xff]
    %v523 = vld [vmem:[#allocation2 + $0x2e0] sm:$0xff]
    %v524 = vld [vmem:[#allocation2 + $0x2e8] sm:$0xff]
    %v525 = vld [vmem:[#allocation2 + $0x2f0] sm:$0xff]
    %v526 = vld [vmem:[#allocation2 + $0x2f8] sm:$0xff]
    %v527 = vld [vmem:[#allocation2 + $0x300] sm:$0xff]
    %v528 = vld [vmem:[#allocation2 + $0x308] sm:$0xff]
    %v529 = vld [vmem:[#allocation2 + $0x310] sm:$0xff]
    %v530 = vld [vmem:[#allocation2 + $0x318] sm:$0xff]
    %v531 = vld [vmem:[#allocation2 + $0x320] sm:$0xff]
    %v532 = vld [vmem:[#allocation2 + $0x328] sm:$0xff]
    %v533 = vld [vmem:[#allocation2 + $0x330] sm:$0xff]
    %v534 = vld [vmem:[#allocation2 + $0x338] sm:$0xff]
    %v535 = vld [vmem:[#allocation2 + $0x340] sm:$0xff]
    %v536 = vld [vmem:[#allocation2 + $0x348] sm:$0xff]
    %v537 = vld [vmem:[#allocation2 + $0x350] sm:$0xff]
    %v538 = vld [vmem:[#allocation2 + $0x358] sm:$0xff]
    %v539 = vld [vmem:[#allocation2 + $0x360] sm:$0xff]
    %v540 = vld [vmem:[#allocation2 + $0x368] sm:$0xff]
    %v541 = vld [vmem:[#allocation2 + $0x370] sm:$0xff]
    %v542 = vld [vmem:[#allocation2 + $0x378] sm:$0xff]
    %v543 = vld [vmem:[#allocation2 + $0x380] sm:$0xff]
    %v544 = vld [vmem:[#allocation2 + $0x388] sm:$0xff]
    %v545 = vld [vmem:[#allocation2 + $0x390] sm:$0xff]
    %v546 = vld [vmem:[#allocation2 + $0x398] sm:$0xff]
    %v547 = vld [vmem:[#allocation2 + $0x3a0] sm:$0xff]
    %v548 = vld [vmem:[#allocation2 + $0x3a8] sm:$0xff]
    %v549 = vld [vmem:[#allocation2 + $0x3b0] sm:$0xff]
    %v550 = vld [vmem:[#allocation2 + $0x3b8] sm:$0xff]
    %v551 = vld [vmem:[#allocation2 + $0x3c0] sm:$0xff]
    %v552 = vld [vmem:[#allocation2 + $0x3c8] sm:$0xff]
    %v553 = vld [vmem:[#allocation2 + $0x3d0] sm:$0xff]
    %v554 = vld [vmem:[#allocation2 + $0x3d8] sm:$0xff]
    %v555 = vld [vmem:[#allocation2 + $0x3e0] sm:$0xff]
    %v556 = vld [vmem:[#allocation2 + $0x3e8] sm:$0xff]
    %v557 = vld [vmem:[#allocation2 + $0x3f0] sm:$0xff]
    %v558 = vld [vmem:[#allocation2 + $0x3f8] sm:$0xff]
    %v559 = vld [vmem:[#allocation2 + $0x400] sm:$0xff]
    %v560 = vld [vmem:[#allocation2 + $0x408] sm:$0xff]
    %v561 = vld [vmem:[#allocation2 + $0x410] sm:$0xff]
    %v562 = vld [vmem:[#allocation2 + $0x418] sm:$0xff]
    %v563 = vld [vmem:[#allocation2 + $0x420] sm:$0xff]
    %v564 = vld [vmem:[#allocation2 + $0x428] sm:$0xff]
    %v565 = vld [vmem:[#allocation2 + $0x430] sm:$0xff]
    %v566 = vld [vmem:[#allocation2 + $0x438] sm:$0xff]
    %v567 = vld [vmem:[#allocation2 + $0x440] sm:$0xff]
    %v568 = vld [vmem:[#allocation2 + $0x448] sm:$0xff]
    %v569 = vld [vmem:[#allocation2 + $0x450] sm:$0xff]
    %v570 = vld [vmem:[#allocation2 + $0x458] sm:$0xff]
    %v571 = vld [vmem:[#allocation2 + $0x460] sm:$0xff]
    %v572 = vld [vmem:[#allocation2 + $0x468] sm:$0xff]
    %v573 = vld [vmem:[#allocation2 + $0x470] sm:$0xff]
    %v574 = vld [vmem:[#allocation2 + $0x478] sm:$0xff]
    %v575 = vld [vmem:[#allocation2 + $0x480] sm:$0xff]
    %v576 = vld [vmem:[#allocation2 + $0x488] sm:$0xff]
    %v577 = vld [vmem:[#allocation2 + $0x490] sm:$0xff]
    %v578 = vld [vmem:[#allocation2 + $0x498] sm:$0xff]
    %v579 = vld [vmem:[#allocation2 + $0x4a0] sm:$0xff]
    %v580 = vld [vmem:[#allocation2 + $0x4a8] sm:$0xff]
    %v581 = vld [vmem:[#allocation2 + $0x4b0] sm:$0xff]
    %v582 = vld [vmem:[#allocation2 + $0x4b8] sm:$0xff]
    %v583 = vld [vmem:[#allocation2 + $0x4c0] sm:$0xff]
    %v584 = vld [vmem:[#allocation2 + $0x4c8] sm:$0xff]
    %v585 = vld [vmem:[#allocation2 + $0x4d0] sm:$0xff]
    %v586 = vld [vmem:[#allocation2 + $0x4d8] sm:$0xff]
    %v587 = vld [vmem:[#allocation2 + $0x4e0] sm:$0xff]
    %v588 = vld [vmem:[#allocation2 + $0x4e8] sm:$0xff]
    %v589 = vld [vmem:[#allocation2 + $0x4f0] sm:$0xff]
    %v590 = vld [vmem:[#allocation2 + $0x4f8] sm:$0xff]
    %v591 = vld [vmem:[#allocation2 + $0x500] sm:$0xff]
    %v592 = vld [vmem:[#allocation2 + $0x508] sm:$0xff]
    %v593 = vld [vmem:[#allocation2 + $0x510] sm:$0xff]
    %v594 = vld [vmem:[#allocation2 + $0x518] sm:$0xff]
    %v595 = vld [vmem:[#allocation2 + $0x520] sm:$0xff]
    %v596 = vld [vmem:[#allocation2 + $0x528] sm:$0xff]
    %v597 = vld [vmem:[#allocation2 + $0x530] sm:$0xff]
    %v598 = vld [vmem:[#allocation2 + $0x538] sm:$0xff]
    %v599 = vld [vmem:[#allocation2 + $0x540] sm:$0xff]
    %v600 = vld [vmem:[#allocation2 + $0x548] sm:$0xff]
    %v601 = vld [vmem:[#allocation2 + $0x550] sm:$0xff]
    %v602 = vld [vmem:[#allocation2 + $0x558] sm:$0xff]
    %v603 = vld [vmem:[#allocation2 + $0x560] sm:$0xff]
    %v604 = vld [vmem:[#allocation2 + $0x568] sm:$0xff]
    %v605 = vld [vmem:[#allocation2 + $0x570] sm:$0xff]
    %v606 = vld [vmem:[#allocation2 + $0x578] sm:$0xff]
    %v607 = vld [vmem:[#allocation2 + $0x580] sm:$0xff]
    %v608 = vld [vmem:[#allocation2 + $0x588] sm:$0xff]
    %v609 = vld [vmem:[#allocation2 + $0x590] sm:$0xff]
    %v610 = vld [vmem:[#allocation2 + $0x598] sm:$0xff]
    %v611 = vld [vmem:[#allocation2 + $0x5a0] sm:$0xff]
    %v612 = vld [vmem:[#allocation2 + $0x5a8] sm:$0xff]
    %v613 = vld [vmem:[#allocation2 + $0x5b0] sm:$0xff]
    %v614 = vld [vmem:[#allocation2 + $0x5b8] sm:$0xff]
    %v615 = vld [vmem:[#allocation2 + $0x5c0] sm:$0xff]
    %v616 = vld [vmem:[#allocation2 + $0x5c8] sm:$0xff]
    %v617 = vld [vmem:[#allocation2 + $0x5d0] sm:$0xff]
    %v618 = vld [vmem:[#allocation2 + $0x5d8] sm:$0xff]
    %v619 = vld [vmem:[#allocation2 + $0x5e0] sm:$0xff]
    %v620 = vld [vmem:[#allocation2 + $0x5e8] sm:$0xff]
    %v621 = vld [vmem:[#allocation2 + $0x5f0] sm:$0xff]
    %v622 = vld [vmem:[#allocation2 + $0x5f8] sm:$0xff]
    %v623 = vld [vmem:[#allocation2 + $0x600] sm:$0xff]
    %v624 = vld [vmem:[#allocation2 + $0x608] sm:$0xff]
    %v625 = vld [vmem:[#allocation2 + $0x610] sm:$0xff]
    %v626 = vld [vmem:[#allocation2 + $0x618] sm:$0xff]
    %v627 = vld [vmem:[#allocation2 + $0x620] sm:$0xff]
    %v628 = vld [vmem:[#allocation2 + $0x628] sm:$0xff]
    %v629 = vld [vmem:[#allocation2 + $0x630] sm:$0xff]
    %v630 = vld [vmem:[#allocation2 + $0x638] sm:$0xff]
    %v631 = vld [vmem:[#allocation2 + $0x640] sm:$0xff]
    %v632 = vld [vmem:[#allocation2 + $0x648] sm:$0xff]
    %v633 = vld [vmem:[#allocation2 + $0x650] sm:$0xff]
    %v634 = vld [vmem:[#allocation2 + $0x658] sm:$0xff]
    %v635 = vld [vmem:[#allocation2 + $0x660] sm:$0xff]
    %v636 = vld [vmem:[#allocation2 + $0x668] sm:$0xff]
    %v637 = vld [vmem:[#allocation2 + $0x670] sm:$0xff]
    %v638 = vld [vmem:[#allocation2 + $0x678] sm:$0xff]
    %v639 = vld [vmem:[#allocation2 + $0x680] sm:$0xff]
    %v640 = vld [vmem:[#allocation2 + $0x688] sm:$0xff]
    %v641 = vld [vmem:[#allocation2 + $0x690] sm:$0xff]
    %v642 = vld [vmem:[#allocation2 + $0x698] sm:$0xff]
    %v643 = vld [vmem:[#allocation2 + $0x6a0] sm:$0xff]
    %v644 = vld [vmem:[#allocation2 + $0x6a8] sm:$0xff]
    %v645 = vld [vmem:[#allocation2 + $0x6b0] sm:$0xff]
    %v646 = vld [vmem:[#allocation2 + $0x6b8] sm:$0xff]
    %v647 = vld [vmem:[#allocation2 + $0x6c0] sm:$0xff]
    %v648 = vld [vmem:[#allocation2 + $0x6c8] sm:$0xff]
    %v649 = vld [vmem:[#allocation2 + $0x6d0] sm:$0xff]
    %v650 = vld [vmem:[#allocation2 + $0x6d8] sm:$0xff]
    %v651 = vld [vmem:[#allocation2 + $0x6e0] sm:$0xff]
    %v652 = vld [vmem:[#allocation2 + $0x6e8] sm:$0xff]
    %v653 = vld [vmem:[#allocation2 + $0x6f0] sm:$0xff]
    %v654 = vld [vmem:[#allocation2 + $0x6f8] sm:$0xff]
    %v655 = vld [vmem:[#allocation2 + $0x700] sm:$0xff]
    %v656 = vld [vmem:[#allocation2 + $0x708] sm:$0xff]
    %v657 = vld [vmem:[#allocation2 + $0x710] sm:$0xff]
    %v658 = vld [vmem:[#allocation2 + $0x718] sm:$0xff]
    %v659 = vld [vmem:[#allocation2 + $0x720] sm:$0xff]
    %v660 = vld [vmem:[#allocation2 + $0x728] sm:$0xff]
    %v661 = vld [vmem:[#allocation2 + $0x730] sm:$0xff]
    %v662 = vld [vmem:[#allocation2 + $0x738] sm:$0xff]
    %v663 = vld [vmem:[#allocation2 + $0x740] sm:$0xff]
    %v664 = vld [vmem:[#allocation2 + $0x748] sm:$0xff]
    %v665 = vld [vmem:[#allocation2 + $0x750] sm:$0xff]
    %v666 = vld [vmem:[#allocation2 + $0x758] sm:$0xff]
    %v667 = vld [vmem:[#allocation2 + $0x760] sm:$0xff]
    %v668 = vld [vmem:[#allocation2 + $0x768] sm:$0xff]
    %v669 = vld [vmem:[#allocation2 + $0x770] sm:$0xff]
    %v670 = vld [vmem:[#allocation2 + $0x778] sm:$0xff]
    %v671 = vld [vmem:[#allocation2 + $0x780] sm:$0xff]
    %v672 = vld [vmem:[#allocation2 + $0x788] sm:$0xff]
    %v673 = vld [vmem:[#allocation2 + $0x790] sm:$0xff]
    %v674 = vld [vmem:[#allocation2 + $0x798] sm:$0xff]
    %v675 = vld [vmem:[#allocation2 + $0x7a0] sm:$0xff]
    %v676 = vld [vmem:[#allocation2 + $0x7a8] sm:$0xff]
    %v677 = vld [vmem:[#allocation2 + $0x7b0] sm:$0xff]
    %v678 = vld [vmem:[#allocation2 + $0x7b8] sm:$0xff]
    %v679 = vld [vmem:[#allocation2 + $0x7c0] sm:$0xff]
    %v680 = vld [vmem:[#allocation2 + $0x7c8] sm:$0xff]
    %v681 = vld [vmem:[#allocation2 + $0x7d0] sm:$0xff]
    %v682 = vld [vmem:[#allocation2 + $0x7d8] sm:$0xff]
    %v683 = vld [vmem:[#allocation2 + $0x7e0] sm:$0xff]
    %v684 = vld [vmem:[#allocation2 + $0x7e8] sm:$0xff]
    %v685 = vld [vmem:[#allocation2 + $0x7f0] sm:$0xff]
    %v686 = vld [vmem:[#allocation2 + $0x7f8] sm:$0xff]
    %v687 = vld [vmem:[%s6] sm:$0xf]
    %v689 = vlaneseq
    %v690 = vshrl.u32 %v689, 7
    %v691 = vsub.s32 0, %v690
    %v692 = vrot.slane %v687, %v691
    %v693 = vlaneseq
    %v694 = vshrl.u32 %v693, 7
    %v695 = vsub.s32 1, %v694
    %v696 = vrot.slane %v687, %v695
    %v697 = vlaneseq
    %v698 = vshrl.u32 %v697, 7
    %v699 = vsub.s32 2, %v698
    %v700 = vrot.slane %v687, %v699
    %v701 = vlaneseq
    %v702 = vshrl.u32 %v701, 7
    %v703 = vsub.s32 3, %v702
    %v704 = vrot.slane %v687, %v703
    %v965 = vunpack.c.l.b16 %v431
    %v966 = vunpack.c.h.b16 %v431
    %v967 = vunpack.c.l.b16 %v432
    %v968 = vunpack.c.h.b16 %v432
    %v969 = vunpack.c.l.b16 %v433
    %v970 = vunpack.c.h.b16 %v433
    %v971 = vunpack.c.l.b16 %v434
    %v972 = vunpack.c.h.b16 %v434
    %v973 = vunpack.c.l.b16 %v435
    %v974 = vunpack.c.h.b16 %v435
    %v975 = vunpack.c.l.b16 %v436
    %v976 = vunpack.c.h.b16 %v436
    %v977 = vunpack.c.l.b16 %v437
    %v978 = vunpack.c.h.b16 %v437
    %v979 = vunpack.c.l.b16 %v438
    %v980 = vunpack.c.h.b16 %v438
    %v981 = vunpack.c.l.b16 %v439
    %v982 = vunpack.c.h.b16 %v439
    %v983 = vunpack.c.l.b16 %v440
    %v984 = vunpack.c.h.b16 %v440
    %v985 = vunpack.c.l.b16 %v441
    %v986 = vunpack.c.h.b16 %v441
    %v987 = vunpack.c.l.b16 %v442
    %v988 = vunpack.c.h.b16 %v442
    %v989 = vunpack.c.l.b16 %v443
    %v990 = vunpack.c.h.b16 %v443
    %v991 = vunpack.c.l.b16 %v444
    %v992 = vunpack.c.h.b16 %v444
    %v993 = vunpack.c.l.b16 %v445
    %v994 = vunpack.c.h.b16 %v445
    %v995 = vunpack.c.l.b16 %v446
    %v996 = vunpack.c.h.b16 %v446
    %v997 = vunpack.c.l.b16 %v447
    %v998 = vunpack.c.h.b16 %v447
    %v999 = vunpack.c.l.b16 %v448
    %v1000 = vunpack.c.h.b16 %v448
    %v1001 = vunpack.c.l.b16 %v449
    %v1002 = vunpack.c.h.b16 %v449
    %v1003 = vunpack.c.l.b16 %v450
    %v1004 = vunpack.c.h.b16 %v450
    %v1005 = vunpack.c.l.b16 %v451
    %v1006 = vunpack.c.h.b16 %v451
    %v1007 = vunpack.c.l.b16 %v452
    %v1008 = vunpack.c.h.b16 %v452
    %v1009 = vunpack.c.l.b16 %v453
    %v1010 = vunpack.c.h.b16 %v453
    %v1011 = vunpack.c.l.b16 %v454
    %v1012 = vunpack.c.h.b16 %v454
    %v1013 = vunpack.c.l.b16 %v455
    %v1014 = vunpack.c.h.b16 %v455
    %v1015 = vunpack.c.l.b16 %v456
    %v1016 = vunpack.c.h.b16 %v456
    %v1017 = vunpack.c.l.b16 %v457
    %v1018 = vunpack.c.h.b16 %v457
    %v1019 = vunpack.c.l.b16 %v458
    %v1020 = vunpack.c.h.b16 %v458
    %v1021 = vunpack.c.l.b16 %v459
    %v1022 = vunpack.c.h.b16 %v459
    %v1023 = vunpack.c.l.b16 %v460
    %v1024 = vunpack.c.h.b16 %v460
    %v1025 = vunpack.c.l.b16 %v461
    %v1026 = vunpack.c.h.b16 %v461
    %v1027 = vunpack.c.l.b16 %v462
    %v1028 = vunpack.c.h.b16 %v462
    %v1029 = vunpack.c.l.b16 %v463
    %v1030 = vunpack.c.h.b16 %v463
    %v1031 = vunpack.c.l.b16 %v464
    %v1032 = vunpack.c.h.b16 %v464
    %v1033 = vunpack.c.l.b16 %v465
    %v1034 = vunpack.c.h.b16 %v465
    %v1035 = vunpack.c.l.b16 %v466
    %v1036 = vunpack.c.h.b16 %v466
    %v1037 = vunpack.c.l.b16 %v467
    %v1038 = vunpack.c.h.b16 %v467
    %v1039 = vunpack.c.l.b16 %v468
    %v1040 = vunpack.c.h.b16 %v468
    %v1041 = vunpack.c.l.b16 %v469
    %v1042 = vunpack.c.h.b16 %v469
    %v1043 = vunpack.c.l.b16 %v470
    %v1044 = vunpack.c.h.b16 %v470
    %v1045 = vunpack.c.l.b16 %v471
    %v1046 = vunpack.c.h.b16 %v471
    %v1047 = vunpack.c.l.b16 %v472
    %v1048 = vunpack.c.h.b16 %v472
    %v1049 = vunpack.c.l.b16 %v473
    %v1050 = vunpack.c.h.b16 %v473
    %v1051 = vunpack.c.l.b16 %v474
    %v1052 = vunpack.c.h.b16 %v474
    %v1053 = vunpack.c.l.b16 %v475
    %v1054 = vunpack.c.h.b16 %v475
    %v1055 = vunpack.c.l.b16 %v476
    %v1056 = vunpack.c.h.b16 %v476
    %v1057 = vunpack.c.l.b16 %v477
    %v1058 = vunpack.c.h.b16 %v477
    %v1059 = vunpack.c.l.b16 %v478
    %v1060 = vunpack.c.h.b16 %v478
    %v1061 = vunpack.c.l.b16 %v479
    %v1062 = vunpack.c.h.b16 %v479
    %v1063 = vunpack.c.l.b16 %v480
    %v1064 = vunpack.c.h.b16 %v480
    %v1065 = vunpack.c.l.b16 %v481
    %v1066 = vunpack.c.h.b16 %v481
    %v1067 = vunpack.c.l.b16 %v482
    %v1068 = vunpack.c.h.b16 %v482
    %v1069 = vunpack.c.l.b16 %v483
    %v1070 = vunpack.c.h.b16 %v483
    %v1071 = vunpack.c.l.b16 %v484
    %v1072 = vunpack.c.h.b16 %v484
    %v1073 = vunpack.c.l.b16 %v485
    %v1074 = vunpack.c.h.b16 %v485
    %v1075 = vunpack.c.l.b16 %v486
    %v1076 = vunpack.c.h.b16 %v486
    %v1077 = vunpack.c.l.b16 %v487
    %v1078 = vunpack.c.h.b16 %v487
    %v1079 = vunpack.c.l.b16 %v488
    %v1080 = vunpack.c.h.b16 %v488
    %v1081 = vunpack.c.l.b16 %v489
    %v1082 = vunpack.c.h.b16 %v489
    %v1083 = vunpack.c.l.b16 %v490
    %v1084 = vunpack.c.h.b16 %v490
    %v1085 = vunpack.c.l.b16 %v491
    %v1086 = vunpack.c.h.b16 %v491
    %v1087 = vunpack.c.l.b16 %v492
    %v1088 = vunpack.c.h.b16 %v492
    %v1089 = vunpack.c.l.b16 %v493
    %v1090 = vunpack.c.h.b16 %v493
    %v1091 = vunpack.c.l.b16 %v494
    %v1092 = vunpack.c.h.b16 %v494
    %v1093 = vunpack.c.l.b16 %v495
    %v1094 = vunpack.c.h.b16 %v495
    %v1095 = vunpack.c.l.b16 %v496
    %v1096 = vunpack.c.h.b16 %v496
    %v1097 = vunpack.c.l.b16 %v497
    %v1098 = vunpack.c.h.b16 %v497
    %v1099 = vunpack.c.l.b16 %v498
    %v1100 = vunpack.c.h.b16 %v498
    %v1101 = vunpack.c.l.b16 %v499
    %v1102 = vunpack.c.h.b16 %v499
    %v1103 = vunpack.c.l.b16 %v500
    %v1104 = vunpack.c.h.b16 %v500
    %v1105 = vunpack.c.l.b16 %v501
    %v1106 = vunpack.c.h.b16 %v501
    %v1107 = vunpack.c.l.b16 %v502
    %v1108 = vunpack.c.h.b16 %v502
    %v1109 = vunpack.c.l.b16 %v503
    %v1110 = vunpack.c.h.b16 %v503
    %v1111 = vunpack.c.l.b16 %v504
    %v1112 = vunpack.c.h.b16 %v504
    %v1113 = vunpack.c.l.b16 %v505
    %v1114 = vunpack.c.h.b16 %v505
    %v1115 = vunpack.c.l.b16 %v506
    %v1116 = vunpack.c.h.b16 %v506
    %v1117 = vunpack.c.l.b16 %v507
    %v1118 = vunpack.c.h.b16 %v507
    %v1119 = vunpack.c.l.b16 %v508
    %v1120 = vunpack.c.h.b16 %v508
    %v1121 = vunpack.c.l.b16 %v509
    %v1122 = vunpack.c.h.b16 %v509
    %v1123 = vunpack.c.l.b16 %v510
    %v1124 = vunpack.c.h.b16 %v510
    %v1125 = vunpack.c.l.b16 %v511
    %v1126 = vunpack.c.h.b16 %v511
    %v1127 = vunpack.c.l.b16 %v512
    %v1128 = vunpack.c.h.b16 %v512
    %v1129 = vunpack.c.l.b16 %v513
    %v1130 = vunpack.c.h.b16 %v513
    %v1131 = vunpack.c.l.b16 %v514
    %v1132 = vunpack.c.h.b16 %v514
    %v1133 = vunpack.c.l.b16 %v515
    %v1134 = vunpack.c.h.b16 %v515
    %v1135 = vunpack.c.l.b16 %v516
    %v1136 = vunpack.c.h.b16 %v516
    %v1137 = vunpack.c.l.b16 %v517
    %v1138 = vunpack.c.h.b16 %v517
    %v1139 = vunpack.c.l.b16 %v518
    %v1140 = vunpack.c.h.b16 %v518
    %v1141 = vunpack.c.l.b16 %v519
    %v1142 = vunpack.c.h.b16 %v519
    %v1143 = vunpack.c.l.b16 %v520
    %v1144 = vunpack.c.h.b16 %v520
    %v1145 = vunpack.c.l.b16 %v521
    %v1146 = vunpack.c.h.b16 %v521
    %v1147 = vunpack.c.l.b16 %v522
    %v1148 = vunpack.c.h.b16 %v522
    %v1149 = vunpack.c.l.b16 %v523
    %v1150 = vunpack.c.h.b16 %v523
    %v1151 = vunpack.c.l.b16 %v524
    %v1152 = vunpack.c.h.b16 %v524
    %v1153 = vunpack.c.l.b16 %v525
    %v1154 = vunpack.c.h.b16 %v525
    %v1155 = vunpack.c.l.b16 %v526
    %v1156 = vunpack.c.h.b16 %v526
    %v1157 = vunpack.c.l.b16 %v527
    %v1158 = vunpack.c.h.b16 %v527
    %v1159 = vunpack.c.l.b16 %v528
    %v1160 = vunpack.c.h.b16 %v528
    %v1161 = vunpack.c.l.b16 %v529
    %v1162 = vunpack.c.h.b16 %v529
    %v1163 = vunpack.c.l.b16 %v530
    %v1164 = vunpack.c.h.b16 %v530
    %v1165 = vunpack.c.l.b16 %v531
    %v1166 = vunpack.c.h.b16 %v531
    %v1167 = vunpack.c.l.b16 %v532
    %v1168 = vunpack.c.h.b16 %v532
    %v1169 = vunpack.c.l.b16 %v533
    %v1170 = vunpack.c.h.b16 %v533
    %v1171 = vunpack.c.l.b16 %v534
    %v1172 = vunpack.c.h.b16 %v534
    %v1173 = vunpack.c.l.b16 %v535
    %v1174 = vunpack.c.h.b16 %v535
    %v1175 = vunpack.c.l.b16 %v536
    %v1176 = vunpack.c.h.b16 %v536
    %v1177 = vunpack.c.l.b16 %v537
    %v1178 = vunpack.c.h.b16 %v537
    %v1179 = vunpack.c.l.b16 %v538
    %v1180 = vunpack.c.h.b16 %v538
    %v1181 = vunpack.c.l.b16 %v539
    %v1182 = vunpack.c.h.b16 %v539
    %v1183 = vunpack.c.l.b16 %v540
    %v1184 = vunpack.c.h.b16 %v540
    %v1185 = vunpack.c.l.b16 %v541
    %v1186 = vunpack.c.h.b16 %v541
    %v1187 = vunpack.c.l.b16 %v542
    %v1188 = vunpack.c.h.b16 %v542
    %v1189 = vunpack.c.l.b16 %v543
    %v1190 = vunpack.c.h.b16 %v543
    %v1191 = vunpack.c.l.b16 %v544
    %v1192 = vunpack.c.h.b16 %v544
    %v1193 = vunpack.c.l.b16 %v545
    %v1194 = vunpack.c.h.b16 %v545
    %v1195 = vunpack.c.l.b16 %v546
    %v1196 = vunpack.c.h.b16 %v546
    %v1197 = vunpack.c.l.b16 %v547
    %v1198 = vunpack.c.h.b16 %v547
    %v1199 = vunpack.c.l.b16 %v548
    %v1200 = vunpack.c.h.b16 %v548
    %v1201 = vunpack.c.l.b16 %v549
    %v1202 = vunpack.c.h.b16 %v549
    %v1203 = vunpack.c.l.b16 %v550
    %v1204 = vunpack.c.h.b16 %v550
    %v1205 = vunpack.c.l.b16 %v551
    %v1206 = vunpack.c.h.b16 %v551
    %v1207 = vunpack.c.l.b16 %v552
    %v1208 = vunpack.c.h.b16 %v552
    %v1209 = vunpack.c.l.b16 %v553
    %v1210 = vunpack.c.h.b16 %v553
    %v1211 = vunpack.c.l.b16 %v554
    %v1212 = vunpack.c.h.b16 %v554
    %v1213 = vunpack.c.l.b16 %v555
    %v1214 = vunpack.c.h.b16 %v555
    %v1215 = vunpack.c.l.b16 %v556
    %v1216 = vunpack.c.h.b16 %v556
    %v1217 = vunpack.c.l.b16 %v557
    %v1218 = vunpack.c.h.b16 %v557
    %v1219 = vunpack.c.l.b16 %v558
    %v1220 = vunpack.c.h.b16 %v558
    %v1221 = vunpack.c.l.b16 %v559
    %v1222 = vunpack.c.h.b16 %v559
    %v1223 = vunpack.c.l.b16 %v560
    %v1224 = vunpack.c.h.b16 %v560
    %v1225 = vunpack.c.l.b16 %v561
    %v1226 = vunpack.c.h.b16 %v561
    %v1227 = vunpack.c.l.b16 %v562
    %v1228 = vunpack.c.h.b16 %v562
    %v1229 = vunpack.c.l.b16 %v563
    %v1230 = vunpack.c.h.b16 %v563
    %v1231 = vunpack.c.l.b16 %v564
    %v1232 = vunpack.c.h.b16 %v564
    %v1233 = vunpack.c.l.b16 %v565
    %v1234 = vunpack.c.h.b16 %v565
    %v1235 = vunpack.c.l.b16 %v566
    %v1236 = vunpack.c.h.b16 %v566
    %v1237 = vunpack.c.l.b16 %v567
    %v1238 = vunpack.c.h.b16 %v567
    %v1239 = vunpack.c.l.b16 %v568
    %v1240 = vunpack.c.h.b16 %v568
    %v1241 = vunpack.c.l.b16 %v569
    %v1242 = vunpack.c.h.b16 %v569
    %v1243 = vunpack.c.l.b16 %v570
    %v1244 = vunpack.c.h.b16 %v570
    %v1245 = vunpack.c.l.b16 %v571
    %v1246 = vunpack.c.h.b16 %v571
    %v1247 = vunpack.c.l.b16 %v572
    %v1248 = vunpack.c.h.b16 %v572
    %v1249 = vunpack.c.l.b16 %v573
    %v1250 = vunpack.c.h.b16 %v573
    %v1251 = vunpack.c.l.b16 %v574
    %v1252 = vunpack.c.h.b16 %v574
    %v1253 = vunpack.c.l.b16 %v575
    %v1254 = vunpack.c.h.b16 %v575
    %v1255 = vunpack.c.l.b16 %v576
    %v1256 = vunpack.c.h.b16 %v576
    %v1257 = vunpack.c.l.b16 %v577
    %v1258 = vunpack.c.h.b16 %v577
    %v1259 = vunpack.c.l.b16 %v578
    %v1260 = vunpack.c.h.b16 %v578
    %v1261 = vunpack.c.l.b16 %v579
    %v1262 = vunpack.c.h.b16 %v579
    %v1263 = vunpack.c.l.b16 %v580
    %v1264 = vunpack.c.h.b16 %v580
    %v1265 = vunpack.c.l.b16 %v581
    %v1266 = vunpack.c.h.b16 %v581
    %v1267 = vunpack.c.l.b16 %v582
    %v1268 = vunpack.c.h.b16 %v582
    %v1269 = vunpack.c.l.b16 %v583
    %v1270 = vunpack.c.h.b16 %v583
    %v1271 = vunpack.c.l.b16 %v584
    %v1272 = vunpack.c.h.b16 %v584
    %v1273 = vunpack.c.l.b16 %v585
    %v1274 = vunpack.c.h.b16 %v585
    %v1275 = vunpack.c.l.b16 %v586
    %v1276 = vunpack.c.h.b16 %v586
    %v1277 = vunpack.c.l.b16 %v587
    %v1278 = vunpack.c.h.b16 %v587
    %v1279 = vunpack.c.l.b16 %v588
    %v1280 = vunpack.c.h.b16 %v588
    %v1281 = vunpack.c.l.b16 %v589
    %v1282 = vunpack.c.h.b16 %v589
    %v1283 = vunpack.c.l.b16 %v590
    %v1284 = vunpack.c.h.b16 %v590
    %v1285 = vunpack.c.l.b16 %v591
    %v1286 = vunpack.c.h.b16 %v591
    %v1287 = vunpack.c.l.b16 %v592
    %v1288 = vunpack.c.h.b16 %v592
    %v1289 = vunpack.c.l.b16 %v593
    %v1290 = vunpack.c.h.b16 %v593
    %v1291 = vunpack.c.l.b16 %v594
    %v1292 = vunpack.c.h.b16 %v594
    %v1293 = vunpack.c.l.b16 %v595
    %v1294 = vunpack.c.h.b16 %v595
    %v1295 = vunpack.c.l.b16 %v596
    %v1296 = vunpack.c.h.b16 %v596
    %v1297 = vunpack.c.l.b16 %v597
    %v1298 = vunpack.c.h.b16 %v597
    %v1299 = vunpack.c.l.b16 %v598
    %v1300 = vunpack.c.h.b16 %v598
    %v1301 = vunpack.c.l.b16 %v599
    %v1302 = vunpack.c.h.b16 %v599
    %v1303 = vunpack.c.l.b16 %v600
    %v1304 = vunpack.c.h.b16 %v600
    %v1305 = vunpack.c.l.b16 %v601
    %v1306 = vunpack.c.h.b16 %v601
    %v1307 = vunpack.c.l.b16 %v602
    %v1308 = vunpack.c.h.b16 %v602
    %v1309 = vunpack.c.l.b16 %v603
    %v1310 = vunpack.c.h.b16 %v603
    %v1311 = vunpack.c.l.b16 %v604
    %v1312 = vunpack.c.h.b16 %v604
    %v1313 = vunpack.c.l.b16 %v605
    %v1314 = vunpack.c.h.b16 %v605
    %v1315 = vunpack.c.l.b16 %v606
    %v1316 = vunpack.c.h.b16 %v606
    %v1317 = vunpack.c.l.b16 %v607
    %v1318 = vunpack.c.h.b16 %v607
    %v1319 = vunpack.c.l.b16 %v608
    %v1320 = vunpack.c.h.b16 %v608
    %v1321 = vunpack.c.l.b16 %v609
    %v1322 = vunpack.c.h.b16 %v609
    %v1323 = vunpack.c.l.b16 %v610
    %v1324 = vunpack.c.h.b16 %v610
    %v1325 = vunpack.c.l.b16 %v611
    %v1326 = vunpack.c.h.b16 %v611
    %v1327 = vunpack.c.l.b16 %v612
    %v1328 = vunpack.c.h.b16 %v612
    %v1329 = vunpack.c.l.b16 %v613
    %v1330 = vunpack.c.h.b16 %v613
    %v1331 = vunpack.c.l.b16 %v614
    %v1332 = vunpack.c.h.b16 %v614
    %v1333 = vunpack.c.l.b16 %v615
    %v1334 = vunpack.c.h.b16 %v615
    %v1335 = vunpack.c.l.b16 %v616
    %v1336 = vunpack.c.h.b16 %v616
    %v1337 = vunpack.c.l.b16 %v617
    %v1338 = vunpack.c.h.b16 %v617
    %v1339 = vunpack.c.l.b16 %v618
    %v1340 = vunpack.c.h.b16 %v618
    %v1341 = vunpack.c.l.b16 %v619
    %v1342 = vunpack.c.h.b16 %v619
    %v1343 = vunpack.c.l.b16 %v620
    %v1344 = vunpack.c.h.b16 %v620
    %v1345 = vunpack.c.l.b16 %v621
    %v1346 = vunpack.c.h.b16 %v621
    %v1347 = vunpack.c.l.b16 %v622
    %v1348 = vunpack.c.h.b16 %v622
    %v1349 = vunpack.c.l.b16 %v623
    %v1350 = vunpack.c.h.b16 %v623
    %v1351 = vunpack.c.l.b16 %v624
    %v1352 = vunpack.c.h.b16 %v624
    %v1353 = vunpack.c.l.b16 %v625
    %v1354 = vunpack.c.h.b16 %v625
    %v1355 = vunpack.c.l.b16 %v626
    %v1356 = vunpack.c.h.b16 %v626
    %v1357 = vunpack.c.l.b16 %v627
    %v1358 = vunpack.c.h.b16 %v627
    %v1359 = vunpack.c.l.b16 %v628
    %v1360 = vunpack.c.h.b16 %v628
    %v1361 = vunpack.c.l.b16 %v629
    %v1362 = vunpack.c.h.b16 %v629
    %v1363 = vunpack.c.l.b16 %v630
    %v1364 = vunpack.c.h.b16 %v630
    %v1365 = vunpack.c.l.b16 %v631
    %v1366 = vunpack.c.h.b16 %v631
    %v1367 = vunpack.c.l.b16 %v632
    %v1368 = vunpack.c.h.b16 %v632
    %v1369 = vunpack.c.l.b16 %v633
    %v1370 = vunpack.c.h.b16 %v633
    %v1371 = vunpack.c.l.b16 %v634
    %v1372 = vunpack.c.h.b16 %v634
    %v1373 = vunpack.c.l.b16 %v635
    %v1374 = vunpack.c.h.b16 %v635
    %v1375 = vunpack.c.l.b16 %v636
    %v1376 = vunpack.c.h.b16 %v636
    %v1377 = vunpack.c.l.b16 %v637
    %v1378 = vunpack.c.h.b16 %v637
    %v1379 = vunpack.c.l.b16 %v638
    %v1380 = vunpack.c.h.b16 %v638
    %v1381 = vunpack.c.l.b16 %v639
    %v1382 = vunpack.c.h.b16 %v639
    %v1383 = vunpack.c.l.b16 %v640
    %v1384 = vunpack.c.h.b16 %v640
    %v1385 = vunpack.c.l.b16 %v641
    %v1386 = vunpack.c.h.b16 %v641
    %v1387 = vunpack.c.l.b16 %v642
    %v1388 = vunpack.c.h.b16 %v642
    %v1389 = vunpack.c.l.b16 %v643
    %v1390 = vunpack.c.h.b16 %v643
    %v1391 = vunpack.c.l.b16 %v644
    %v1392 = vunpack.c.h.b16 %v644
    %v1393 = vunpack.c.l.b16 %v645
    %v1394 = vunpack.c.h.b16 %v645
    %v1395 = vunpack.c.l.b16 %v646
    %v1396 = vunpack.c.h.b16 %v646
    %v1397 = vunpack.c.l.b16 %v647
    %v1398 = vunpack.c.h.b16 %v647
    %v1399 = vunpack.c.l.b16 %v648
    %v1400 = vunpack.c.h.b16 %v648
    %v1401 = vunpack.c.l.b16 %v649
    %v1402 = vunpack.c.h.b16 %v649
    %v1403 = vunpack.c.l.b16 %v650
    %v1404 = vunpack.c.h.b16 %v650
    %v1405 = vunpack.c.l.b16 %v651
    %v1406 = vunpack.c.h.b16 %v651
    %v1407 = vunpack.c.l.b16 %v652
    %v1408 = vunpack.c.h.b16 %v652
    %v1409 = vunpack.c.l.b16 %v653
    %v1410 = vunpack.c.h.b16 %v653
    %v1411 = vunpack.c.l.b16 %v654
    %v1412 = vunpack.c.h.b16 %v654
    %v1413 = vunpack.c.l.b16 %v655
    %v1414 = vunpack.c.h.b16 %v655
    %v1415 = vunpack.c.l.b16 %v656
    %v1416 = vunpack.c.h.b16 %v656
    %v1417 = vunpack.c.l.b16 %v657
    %v1418 = vunpack.c.h.b16 %v657
    %v1419 = vunpack.c.l.b16 %v658
    %v1420 = vunpack.c.h.b16 %v658
    %v1421 = vunpack.c.l.b16 %v659
    %v1422 = vunpack.c.h.b16 %v659
    %v1423 = vunpack.c.l.b16 %v660
    %v1424 = vunpack.c.h.b16 %v660
    %v1425 = vunpack.c.l.b16 %v661
    %v1426 = vunpack.c.h.b16 %v661
    %v1427 = vunpack.c.l.b16 %v662
    %v1428 = vunpack.c.h.b16 %v662
    %v1429 = vunpack.c.l.b16 %v663
    %v1430 = vunpack.c.h.b16 %v663
    %v1431 = vunpack.c.l.b16 %v664
    %v1432 = vunpack.c.h.b16 %v664
    %v1433 = vunpack.c.l.b16 %v665
    %v1434 = vunpack.c.h.b16 %v665
    %v1435 = vunpack.c.l.b16 %v666
    %v1436 = vunpack.c.h.b16 %v666
    %v1437 = vunpack.c.l.b16 %v667
    %v1438 = vunpack.c.h.b16 %v667
    %v1439 = vunpack.c.l.b16 %v668
    %v1440 = vunpack.c.h.b16 %v668
    %v1441 = vunpack.c.l.b16 %v669
    %v1442 = vunpack.c.h.b16 %v669
    %v1443 = vunpack.c.l.b16 %v670
    %v1444 = vunpack.c.h.b16 %v670
    %v1445 = vunpack.c.l.b16 %v671
    %v1446 = vunpack.c.h.b16 %v671
    %v1447 = vunpack.c.l.b16 %v672
    %v1448 = vunpack.c.h.b16 %v672
    %v1449 = vunpack.c.l.b16 %v673
    %v1450 = vunpack.c.h.b16 %v673
    %v1451 = vunpack.c.l.b16 %v674
    %v1452 = vunpack.c.h.b16 %v674
    %v1453 = vunpack.c.l.b16 %v675
    %v1454 = vunpack.c.h.b16 %v675
    %v1455 = vunpack.c.l.b16 %v676
    %v1456 = vunpack.c.h.b16 %v676
    %v1457 = vunpack.c.l.b16 %v677
    %v1458 = vunpack.c.h.b16 %v677
    %v1459 = vunpack.c.l.b16 %v678
    %v1460 = vunpack.c.h.b16 %v678
    %v1461 = vunpack.c.l.b16 %v679
    %v1462 = vunpack.c.h.b16 %v679
    %v1463 = vunpack.c.l.b16 %v680
    %v1464 = vunpack.c.h.b16 %v680
    %v1465 = vunpack.c.l.b16 %v681
    %v1466 = vunpack.c.h.b16 %v681
    %v1467 = vunpack.c.l.b16 %v682
    %v1468 = vunpack.c.h.b16 %v682
    %v1469 = vunpack.c.l.b16 %v683
    %v1470 = vunpack.c.h.b16 %v683
    %v1471 = vunpack.c.l.b16 %v684
    %v1472 = vunpack.c.h.b16 %v684
    %v1473 = vunpack.c.l.b16 %v685
    %v1474 = vunpack.c.h.b16 %v685
    %v1475 = vunpack.c.l.b16 %v686
    %v1476 = vunpack.c.h.b16 %v686
    %v1477 = vpack.c.b16 %v969, %v965
    %v1478 = vpack.c.b16 %v970, %v966
    %v1479 = vpack.c.b16 %v971, %v967
    %v1480 = vpack.c.b16 %v972, %v968
    %v1481 = vpack.c.b16 %v977, %v973
    %v1482 = vpack.c.b16 %v978, %v974
    %v1483 = vpack.c.b16 %v979, %v975
    %v1484 = vpack.c.b16 %v980, %v976
    %v1485 = vpack.c.b16 %v985, %v981
    %v1486 = vpack.c.b16 %v986, %v982
    %v1487 = vpack.c.b16 %v987, %v983
    %v1488 = vpack.c.b16 %v988, %v984
    %v1489 = vpack.c.b16 %v993, %v989
    %v1490 = vpack.c.b16 %v994, %v990
    %v1491 = vpack.c.b16 %v995, %v991
    %v1492 = vpack.c.b16 %v996, %v992
    %v1493 = vpack.c.b16 %v1001, %v997
    %v1494 = vpack.c.b16 %v1002, %v998
    %v1495 = vpack.c.b16 %v1003, %v999
    %v1496 = vpack.c.b16 %v1004, %v1000
    %v1497 = vpack.c.b16 %v1009, %v1005
    %v1498 = vpack.c.b16 %v1010, %v1006
    %v1499 = vpack.c.b16 %v1011, %v1007
    %v1500 = vpack.c.b16 %v1012, %v1008
    %v1501 = vpack.c.b16 %v1017, %v1013
    %v1502 = vpack.c.b16 %v1018, %v1014
    %v1503 = vpack.c.b16 %v1019, %v1015
    %v1504 = vpack.c.b16 %v1020, %v1016
    %v1505 = vpack.c.b16 %v1025, %v1021
    %v1506 = vpack.c.b16 %v1026, %v1022
    %v1507 = vpack.c.b16 %v1027, %v1023
    %v1508 = vpack.c.b16 %v1028, %v1024
    %v1509 = vpack.c.b16 %v1033, %v1029
    %v1510 = vpack.c.b16 %v1034, %v1030
    %v1511 = vpack.c.b16 %v1035, %v1031
    %v1512 = vpack.c.b16 %v1036, %v1032
    %v1513 = vpack.c.b16 %v1041, %v1037
    %v1514 = vpack.c.b16 %v1042, %v1038
    %v1515 = vpack.c.b16 %v1043, %v1039
    %v1516 = vpack.c.b16 %v1044, %v1040
    %v1517 = vpack.c.b16 %v1049, %v1045
    %v1518 = vpack.c.b16 %v1050, %v1046
    %v1519 = vpack.c.b16 %v1051, %v1047
    %v1520 = vpack.c.b16 %v1052, %v1048
    %v1521 = vpack.c.b16 %v1057, %v1053
    %v1522 = vpack.c.b16 %v1058, %v1054
    %v1523 = vpack.c.b16 %v1059, %v1055
    %v1524 = vpack.c.b16 %v1060, %v1056
    %v1525 = vpack.c.b16 %v1065, %v1061
    %v1526 = vpack.c.b16 %v1066, %v1062
    %v1527 = vpack.c.b16 %v1067, %v1063
    %v1528 = vpack.c.b16 %v1068, %v1064
    %v1529 = vpack.c.b16 %v1073, %v1069
    %v1530 = vpack.c.b16 %v1074, %v1070
    %v1531 = vpack.c.b16 %v1075, %v1071
    %v1532 = vpack.c.b16 %v1076, %v1072
    %v1533 = vpack.c.b16 %v1081, %v1077
    %v1534 = vpack.c.b16 %v1082, %v1078
    %v1535 = vpack.c.b16 %v1083, %v1079
    %v1536 = vpack.c.b16 %v1084, %v1080
    %v1537 = vpack.c.b16 %v1089, %v1085
    %v1538 = vpack.c.b16 %v1090, %v1086
    %v1539 = vpack.c.b16 %v1091, %v1087
    %v1540 = vpack.c.b16 %v1092, %v1088
    %v1541 = vpack.c.b16 %v1097, %v1093
    %v1542 = vpack.c.b16 %v1098, %v1094
    %v1543 = vpack.c.b16 %v1099, %v1095
    %v1544 = vpack.c.b16 %v1100, %v1096
    %v1545 = vpack.c.b16 %v1105, %v1101
    %v1546 = vpack.c.b16 %v1106, %v1102
    %v1547 = vpack.c.b16 %v1107, %v1103
    %v1548 = vpack.c.b16 %v1108, %v1104
    %v1549 = vpack.c.b16 %v1113, %v1109
    %v1550 = vpack.c.b16 %v1114, %v1110
    %v1551 = vpack.c.b16 %v1115, %v1111
    %v1552 = vpack.c.b16 %v1116, %v1112
    %v1553 = vpack.c.b16 %v1121, %v1117
    %v1554 = vpack.c.b16 %v1122, %v1118
    %v1555 = vpack.c.b16 %v1123, %v1119
    %v1556 = vpack.c.b16 %v1124, %v1120
    %v1557 = vpack.c.b16 %v1129, %v1125
    %v1558 = vpack.c.b16 %v1130, %v1126
    %v1559 = vpack.c.b16 %v1131, %v1127
    %v1560 = vpack.c.b16 %v1132, %v1128
    %v1561 = vpack.c.b16 %v1137, %v1133
    %v1562 = vpack.c.b16 %v1138, %v1134
    %v1563 = vpack.c.b16 %v1139, %v1135
    %v1564 = vpack.c.b16 %v1140, %v1136
    %v1565 = vpack.c.b16 %v1145, %v1141
    %v1566 = vpack.c.b16 %v1146, %v1142
    %v1567 = vpack.c.b16 %v1147, %v1143
    %v1568 = vpack.c.b16 %v1148, %v1144
    %v1569 = vpack.c.b16 %v1153, %v1149
    %v1570 = vpack.c.b16 %v1154, %v1150
    %v1571 = vpack.c.b16 %v1155, %v1151
    %v1572 = vpack.c.b16 %v1156, %v1152
    %v1573 = vpack.c.b16 %v1161, %v1157
    %v1574 = vpack.c.b16 %v1162, %v1158
    %v1575 = vpack.c.b16 %v1163, %v1159
    %v1576 = vpack.c.b16 %v1164, %v1160
    %v1577 = vpack.c.b16 %v1169, %v1165
    %v1578 = vpack.c.b16 %v1170, %v1166
    %v1579 = vpack.c.b16 %v1171, %v1167
    %v1580 = vpack.c.b16 %v1172, %v1168
    %v1581 = vpack.c.b16 %v1177, %v1173
    %v1582 = vpack.c.b16 %v1178, %v1174
    %v1583 = vpack.c.b16 %v1179, %v1175
    %v1584 = vpack.c.b16 %v1180, %v1176
    %v1585 = vpack.c.b16 %v1185, %v1181
    %v1586 = vpack.c.b16 %v1186, %v1182
    %v1587 = vpack.c.b16 %v1187, %v1183
    %v1588 = vpack.c.b16 %v1188, %v1184
    %v1589 = vpack.c.b16 %v1193, %v1189
    %v1590 = vpack.c.b16 %v1194, %v1190
    %v1591 = vpack.c.b16 %v1195, %v1191
    %v1592 = vpack.c.b16 %v1196, %v1192
    %v1593 = vpack.c.b16 %v1201, %v1197
    %v1594 = vpack.c.b16 %v1202, %v1198
    %v1595 = vpack.c.b16 %v1203, %v1199
    %v1596 = vpack.c.b16 %v1204, %v1200
    %v1597 = vpack.c.b16 %v1209, %v1205
    %v1598 = vpack.c.b16 %v1210, %v1206
    %v1599 = vpack.c.b16 %v1211, %v1207
    %v1600 = vpack.c.b16 %v1212, %v1208
    %v1601 = vpack.c.b16 %v1217, %v1213
    %v1602 = vpack.c.b16 %v1218, %v1214
    %v1603 = vpack.c.b16 %v1219, %v1215
    %v1604 = vpack.c.b16 %v1220, %v1216
    %v1605 = vpack.c.b16 %v1225, %v1221
    %v1606 = vpack.c.b16 %v1226, %v1222
    %v1607 = vpack.c.b16 %v1227, %v1223
    %v1608 = vpack.c.b16 %v1228, %v1224
    %v1609 = vpack.c.b16 %v1233, %v1229
    %v1610 = vpack.c.b16 %v1234, %v1230
    %v1611 = vpack.c.b16 %v1235, %v1231
    %v1612 = vpack.c.b16 %v1236, %v1232
    %v1613 = vpack.c.b16 %v1241, %v1237
    %v1614 = vpack.c.b16 %v1242, %v1238
    %v1615 = vpack.c.b16 %v1243, %v1239
    %v1616 = vpack.c.b16 %v1244, %v1240
    %v1617 = vpack.c.b16 %v1249, %v1245
    %v1618 = vpack.c.b16 %v1250, %v1246
    %v1619 = vpack.c.b16 %v1251, %v1247
    %v1620 = vpack.c.b16 %v1252, %v1248
    %v1621 = vpack.c.b16 %v1257, %v1253
    %v1622 = vpack.c.b16 %v1258, %v1254
    %v1623 = vpack.c.b16 %v1259, %v1255
    %v1624 = vpack.c.b16 %v1260, %v1256
    %v1625 = vpack.c.b16 %v1265, %v1261
    %v1626 = vpack.c.b16 %v1266, %v1262
    %v1627 = vpack.c.b16 %v1267, %v1263
    %v1628 = vpack.c.b16 %v1268, %v1264
    %v1629 = vpack.c.b16 %v1273, %v1269
    %v1630 = vpack.c.b16 %v1274, %v1270
    %v1631 = vpack.c.b16 %v1275, %v1271
    %v1632 = vpack.c.b16 %v1276, %v1272
    %v1633 = vpack.c.b16 %v1281, %v1277
    %v1634 = vpack.c.b16 %v1282, %v1278
    %v1635 = vpack.c.b16 %v1283, %v1279
    %v1636 = vpack.c.b16 %v1284, %v1280
    %v1637 = vpack.c.b16 %v1289, %v1285
    %v1638 = vpack.c.b16 %v1290, %v1286
    %v1639 = vpack.c.b16 %v1291, %v1287
    %v1640 = vpack.c.b16 %v1292, %v1288
    %v1641 = vpack.c.b16 %v1297, %v1293
    %v1642 = vpack.c.b16 %v1298, %v1294
    %v1643 = vpack.c.b16 %v1299, %v1295
    %v1644 = vpack.c.b16 %v1300, %v1296
    %v1645 = vpack.c.b16 %v1305, %v1301
    %v1646 = vpack.c.b16 %v1306, %v1302
    %v1647 = vpack.c.b16 %v1307, %v1303
    %v1648 = vpack.c.b16 %v1308, %v1304
    %v1649 = vpack.c.b16 %v1313, %v1309
    %v1650 = vpack.c.b16 %v1314, %v1310
    %v1651 = vpack.c.b16 %v1315, %v1311
    %v1652 = vpack.c.b16 %v1316, %v1312
    %v1653 = vpack.c.b16 %v1321, %v1317
    %v1654 = vpack.c.b16 %v1322, %v1318
    %v1655 = vpack.c.b16 %v1323, %v1319
    %v1656 = vpack.c.b16 %v1324, %v1320
    %v1657 = vpack.c.b16 %v1329, %v1325
    %v1658 = vpack.c.b16 %v1330, %v1326
    %v1659 = vpack.c.b16 %v1331, %v1327
    %v1660 = vpack.c.b16 %v1332, %v1328
    %v1661 = vpack.c.b16 %v1337, %v1333
    %v1662 = vpack.c.b16 %v1338, %v1334
    %v1663 = vpack.c.b16 %v1339, %v1335
    %v1664 = vpack.c.b16 %v1340, %v1336
    %v1665 = vpack.c.b16 %v1345, %v1341
    %v1666 = vpack.c.b16 %v1346, %v1342
    %v1667 = vpack.c.b16 %v1347, %v1343
    %v1668 = vpack.c.b16 %v1348, %v1344
    %v1669 = vpack.c.b16 %v1353, %v1349
    %v1670 = vpack.c.b16 %v1354, %v1350
    %v1671 = vpack.c.b16 %v1355, %v1351
    %v1672 = vpack.c.b16 %v1356, %v1352
    %v1673 = vpack.c.b16 %v1361, %v1357
    %v1674 = vpack.c.b16 %v1362, %v1358
    %v1675 = vpack.c.b16 %v1363, %v1359
    %v1676 = vpack.c.b16 %v1364, %v1360
    %v1677 = vpack.c.b16 %v1369, %v1365
    %v1678 = vpack.c.b16 %v1370, %v1366
    %v1679 = vpack.c.b16 %v1371, %v1367
    %v1680 = vpack.c.b16 %v1372, %v1368
    %v1681 = vpack.c.b16 %v1377, %v1373
    %v1682 = vpack.c.b16 %v1378, %v1374
    %v1683 = vpack.c.b16 %v1379, %v1375
    %v1684 = vpack.c.b16 %v1380, %v1376
    %v1685 = vpack.c.b16 %v1385, %v1381
    %v1686 = vpack.c.b16 %v1386, %v1382
    %v1687 = vpack.c.b16 %v1387, %v1383
    %v1688 = vpack.c.b16 %v1388, %v1384
    %v1689 = vpack.c.b16 %v1393, %v1389
    %v1690 = vpack.c.b16 %v1394, %v1390
    %v1691 = vpack.c.b16 %v1395, %v1391
    %v1692 = vpack.c.b16 %v1396, %v1392
    %v1693 = vpack.c.b16 %v1401, %v1397
    %v1694 = vpack.c.b16 %v1402, %v1398
    %v1695 = vpack.c.b16 %v1403, %v1399
    %v1696 = vpack.c.b16 %v1404, %v1400
    %v1697 = vpack.c.b16 %v1409, %v1405
    %v1698 = vpack.c.b16 %v1410, %v1406
    %v1699 = vpack.c.b16 %v1411, %v1407
    %v1700 = vpack.c.b16 %v1412, %v1408
    %v1701 = vpack.c.b16 %v1417, %v1413
    %v1702 = vpack.c.b16 %v1418, %v1414
    %v1703 = vpack.c.b16 %v1419, %v1415
    %v1704 = vpack.c.b16 %v1420, %v1416
    %v1705 = vpack.c.b16 %v1425, %v1421
    %v1706 = vpack.c.b16 %v1426, %v1422
    %v1707 = vpack.c.b16 %v1427, %v1423
    %v1708 = vpack.c.b16 %v1428, %v1424
    %v1709 = vpack.c.b16 %v1433, %v1429
    %v1710 = vpack.c.b16 %v1434, %v1430
    %v1711 = vpack.c.b16 %v1435, %v1431
    %v1712 = vpack.c.b16 %v1436, %v1432
    %v1713 = vpack.c.b16 %v1441, %v1437
    %v1714 = vpack.c.b16 %v1442, %v1438
    %v1715 = vpack.c.b16 %v1443, %v1439
    %v1716 = vpack.c.b16 %v1444, %v1440
    %v1717 = vpack.c.b16 %v1449, %v1445
    %v1718 = vpack.c.b16 %v1450, %v1446
    %v1719 = vpack.c.b16 %v1451, %v1447
    %v1720 = vpack.c.b16 %v1452, %v1448
    %v1721 = vpack.c.b16 %v1457, %v1453
    %v1722 = vpack.c.b16 %v1458, %v1454
    %v1723 = vpack.c.b16 %v1459, %v1455
    %v1724 = vpack.c.b16 %v1460, %v1456
    %v1725 = vpack.c.b16 %v1465, %v1461
    %v1726 = vpack.c.b16 %v1466, %v1462
    %v1727 = vpack.c.b16 %v1467, %v1463
    %v1728 = vpack.c.b16 %v1468, %v1464
    %v1729 = vpack.c.b16 %v1473, %v1469
    %v1730 = vpack.c.b16 %v1474, %v1470
    %v1731 = vpack.c.b16 %v1475, %v1471
    %v1732 = vpack.c.b16 %v1476, %v1472
    %1989 = vmatprep.subr.bf16.mxu0 %v1506
    %1990 = vmatpush1.bf16.msra.mxu0 %v1505
    %1991 = vmatprep.subr.bf16.mxu0 %v1502
    %1992 = vmatpush1.bf16.msra.mxu0 %v1501
    %1993 = vmatprep.subr.bf16.mxu0 %v1498
    %1994 = vmatpush1.bf16.msra.mxu0 %v1497
    %1995 = vmatprep.subr.bf16.mxu0 %v1494
    %1996 = vmatpush1.bf16.msra.mxu0 %v1493
    %1997 = vmatprep.subr.bf16.mxu0 %v1490
    %1998 = vmatpush1.bf16.msra.mxu0 %v1489
    %1999 = vmatprep.subr.bf16.mxu0 %v1486
    %2000 = vmatpush1.bf16.msra.mxu0 %v1485
    %2001 = vmatprep.subr.bf16.mxu0 %v1482
    %2002 = vmatpush1.bf16.msra.mxu0 %v1481
    %2003 = vmatprep.subr.bf16.mxu0 %v1478
    %2004 = vmatpush1.bf16.msra.mxu0 %v1477
    %2005 = vmatprep.subr.bf16.mxu0 %v1538
    %2006 = vmatpush2.bf16.msra.mxu0 %v1537
    %2007 = vmatprep.subr.bf16.mxu0 %v1534
    %2008 = vmatpush2.bf16.msra.mxu0 %v1533
    %2009 = vmatprep.subr.bf16.mxu0 %v1530
    %2010 = vmatpush2.bf16.msra.mxu0 %v1529
    %2011 = vmatprep.subr.bf16.mxu0 %v1526
    %2012 = vmatpush2.bf16.msra.mxu0 %v1525
    %2013 = vmatprep.subr.bf16.mxu0 %v1522
    %2014 = vmatpush2.bf16.msra.mxu0 %v1521
    %2015 = vmatprep.subr.bf16.mxu0 %v1518
    %2016 = vmatpush2.bf16.msra.mxu0 %v1517
    %2017 = vmatprep.subr.bf16.mxu0 %v1514
    %2018 = vmatpush2.bf16.msra.mxu0 %v1513
    %2019 = vmatprep.subr.bf16.mxu0 %v1510
    %2020 = vmatpush2.bf16.msra.mxu0 %v1509
    %2021 = vmatprep.mubr.bf16.mxu0 %v424
    %2022 = vmatmul.mubr.bf16.gmra.mxu0 %v423
    %v2023 = vpop.f32.mrf.mxu0
    %v2024 = vadd.f32 %v692, %v2023
    %v2025 = vpop.f32.mrf.mxu0
    %v2026 = vadd.f32 %v696, %v2025
    %v2027 = vpop.f32.mrf.mxu0
    %v2028 = vpop.f32.mrf.mxu0
    %2029 = vdwg.mxu0
    %2030 = vmatprep.subr.bf16.mxu0 %v1570
    %2031 = vmatpush1.bf16.msra.mxu0 %v1569
    %2032 = vmatprep.subr.bf16.mxu0 %v1566
    %2033 = vmatpush1.bf16.msra.mxu0 %v1565
    %2034 = vmatprep.subr.bf16.mxu0 %v1562
    %2035 = vmatpush1.bf16.msra.mxu0 %v1561
    %2036 = vmatprep.subr.bf16.mxu0 %v1558
    %2037 = vmatpush1.bf16.msra.mxu0 %v1557
    %2038 = vmatprep.subr.bf16.mxu0 %v1554
    %2039 = vmatpush1.bf16.msra.mxu0 %v1553
    %2040 = vmatprep.subr.bf16.mxu0 %v1550
    %2041 = vmatpush1.bf16.msra.mxu0 %v1549
    %2042 = vmatprep.subr.bf16.mxu0 %v1546
    %2043 = vmatpush1.bf16.msra.mxu0 %v1545
    %2044 = vmatprep.subr.bf16.mxu0 %v1542
    %2045 = vmatpush1.bf16.msra.mxu0 %v1541
    %2046 = vmatprep.subr.bf16.mxu0 %v1602
    %2047 = vmatpush2.bf16.msra.mxu0 %v1601
    %2048 = vmatprep.subr.bf16.mxu0 %v1598
    %2049 = vmatpush2.bf16.msra.mxu0 %v1597
    %2050 = vmatprep.subr.bf16.mxu0 %v1594
    %2051 = vmatpush2.bf16.msra.mxu0 %v1593
    %2052 = vmatprep.subr.bf16.mxu0 %v1590
    %2053 = vmatpush2.bf16.msra.mxu0 %v1589
    %2054 = vmatprep.subr.bf16.mxu0 %v1586
    %2055 = vmatpush2.bf16.msra.mxu0 %v1585
    %2056 = vmatprep.subr.bf16.mxu0 %v1582
    %2057 = vmatpush2.bf16.msra.mxu0 %v1581
    %2058 = vmatprep.subr.bf16.mxu0 %v1578
    %2059 = vmatpush2.bf16.msra.mxu0 %v1577
    %2060 = vmatprep.subr.bf16.mxu0 %v1574
    %2061 = vmatpush2.bf16.msra.mxu0 %v1573
    %2062 = vmatprep.mubr.bf16.mxu0 %v426
    %2063 = vmatmul.mubr.bf16.gmra.mxu0 %v425
    %v2064 = vpop.f32.mrf.mxu0
    %v2065 = vadd.f32 %v2024, %v2064
    %v2066 = vpop.f32.mrf.mxu0
    %v2067 = vadd.f32 %v2026, %v2066
    %v2068 = vpop.f32.mrf.mxu0
    %v2069 = vpop.f32.mrf.mxu0
    %2070 = vdwg.mxu0
    %2071 = vmatprep.subr.bf16.mxu0 %v1634
    %2072 = vmatpush1.bf16.msra.mxu0 %v1633
    %2073 = vmatprep.subr.bf16.mxu0 %v1630
    %2074 = vmatpush1.bf16.msra.mxu0 %v1629
    %2075 = vmatprep.subr.bf16.mxu0 %v1626
    %2076 = vmatpush1.bf16.msra.mxu0 %v1625
    %2077 = vmatprep.subr.bf16.mxu0 %v1622
    %2078 = vmatpush1.bf16.msra.mxu0 %v1621
    %2079 = vmatprep.subr.bf16.mxu0 %v1618
    %2080 = vmatpush1.bf16.msra.mxu0 %v1617
    %2081 = vmatprep.subr.bf16.mxu0 %v1614
    %2082 = vmatpush1.bf16.msra.mxu0 %v1613
    %2083 = vmatprep.subr.bf16.mxu0 %v1610
    %2084 = vmatpush1.bf16.msra.mxu0 %v1609
    %2085 = vmatprep.subr.bf16.mxu0 %v1606
    %2086 = vmatpush1.bf16.msra.mxu0 %v1605
    %2087 = vmatprep.subr.bf16.mxu0 %v1666
    %2088 = vmatpush2.bf16.msra.mxu0 %v1665
    %2089 = vmatprep.subr.bf16.mxu0 %v1662
    %2090 = vmatpush2.bf16.msra.mxu0 %v1661
    %2091 = vmatprep.subr.bf16.mxu0 %v1658
    %2092 = vmatpush2.bf16.msra.mxu0 %v1657
    %2093 = vmatprep.subr.bf16.mxu0 %v1654
    %2094 = vmatpush2.bf16.msra.mxu0 %v1653
    %2095 = vmatprep.subr.bf16.mxu0 %v1650
    %2096 = vmatpush2.bf16.msra.mxu0 %v1649
    %2097 = vmatprep.subr.bf16.mxu0 %v1646
    %2098 = vmatpush2.bf16.msra.mxu0 %v1645
    %2099 = vmatprep.subr.bf16.mxu0 %v1642
    %2100 = vmatpush2.bf16.msra.mxu0 %v1641
    %2101 = vmatprep.subr.bf16.mxu0 %v1638
    %2102 = vmatpush2.bf16.msra.mxu0 %v1637
    %2103 = vmatprep.mubr.bf16.mxu0 %v428
    %2104 = vmatmul.mubr.bf16.gmra.mxu0 %v427
    %v2105 = vpop.f32.mrf.mxu0
    %v2106 = vadd.f32 %v2065, %v2105
    %v2107 = vpop.f32.mrf.mxu0
    %v2108 = vadd.f32 %v2067, %v2107
    %v2109 = vpop.f32.mrf.mxu0
    %v2110 = vpop.f32.mrf.mxu0
    %2111 = vdwg.mxu0
    %2112 = vmatprep.subr.bf16.mxu0 %v1698
    %2113 = vmatpush1.bf16.msra.mxu0 %v1697
    %2114 = vmatprep.subr.bf16.mxu0 %v1694
    %2115 = vmatpush1.bf16.msra.mxu0 %v1693
    %2116 = vmatprep.subr.bf16.mxu0 %v1690
    %2117 = vmatpush1.bf16.msra.mxu0 %v1689
    %2118 = vmatprep.subr.bf16.mxu0 %v1686
    %2119 = vmatpush1.bf16.msra.mxu0 %v1685
    %2120 = vmatprep.subr.bf16.mxu0 %v1682
    %2121 = vmatpush1.bf16.msra.mxu0 %v1681
    %2122 = vmatprep.subr.bf16.mxu0 %v1678
    %2123 = vmatpush1.bf16.msra.mxu0 %v1677
    %2124 = vmatprep.subr.bf16.mxu0 %v1674
    %2125 = vmatpush1.bf16.msra.mxu0 %v1673
    %2126 = vmatprep.subr.bf16.mxu0 %v1670
    %2127 = vmatpush1.bf16.msra.mxu0 %v1669
    %2128 = vmatprep.subr.bf16.mxu0 %v1730
    %2129 = vmatpush2.bf16.msra.mxu0 %v1729
    %2130 = vmatprep.subr.bf16.mxu0 %v1726
    %2131 = vmatpush2.bf16.msra.mxu0 %v1725
    %2132 = vmatprep.subr.bf16.mxu0 %v1722
    %2133 = vmatpush2.bf16.msra.mxu0 %v1721
    %2134 = vmatprep.subr.bf16.mxu0 %v1718
    %2135 = vmatpush2.bf16.msra.mxu0 %v1717
    %2136 = vmatprep.subr.bf16.mxu0 %v1714
    %2137 = vmatpush2.bf16.msra.mxu0 %v1713
    %2138 = vmatprep.subr.bf16.mxu0 %v1710
    %2139 = vmatpush2.bf16.msra.mxu0 %v1709
    %2140 = vmatprep.subr.bf16.mxu0 %v1706
    %2141 = vmatpush2.bf16.msra.mxu0 %v1705
    %2142 = vmatprep.subr.bf16.mxu0 %v1702
    %2143 = vmatpush2.bf16.msra.mxu0 %v1701
    %2144 = vmatprep.mubr.bf16.mxu0 %v430
    %2145 = vmatmul.mubr.bf16.gmra.mxu0 %v429
    %v2146 = vpop.f32.mrf.mxu0
    %v2147 = vadd.f32 %v2106, %v2146
    %v2148 = vpop.f32.mrf.mxu0
    %v2149 = vadd.f32 %v2108, %v2148
    %v2150 = vpop.f32.mrf.mxu0
    %v2151 = vpop.f32.mrf.mxu0
    %2152 = vdwg.mxu0
    %2153 = vmatprep.subr.bf16.mxu0 %v1508
    %2154 = vmatpush1.bf16.msra.mxu0 %v1507
    %2155 = vmatprep.subr.bf16.mxu0 %v1504
    %2156 = vmatpush1.bf16.msra.mxu0 %v1503
    %2157 = vmatprep.subr.bf16.mxu0 %v1500
    %2158 = vmatpush1.bf16.msra.mxu0 %v1499
    %2159 = vmatprep.subr.bf16.mxu0 %v1496
    %2160 = vmatpush1.bf16.msra.mxu0 %v1495
    %2161 = vmatprep.subr.bf16.mxu0 %v1492
    %2162 = vmatpush1.bf16.msra.mxu0 %v1491
    %2163 = vmatprep.subr.bf16.mxu0 %v1488
    %2164 = vmatpush1.bf16.msra.mxu0 %v1487
    %2165 = vmatprep.subr.bf16.mxu0 %v1484
    %2166 = vmatpush1.bf16.msra.mxu0 %v1483
    %2167 = vmatprep.subr.bf16.mxu0 %v1480
    %2168 = vmatpush1.bf16.msra.mxu0 %v1479
    %2169 = vmatprep.subr.bf16.mxu0 %v1540
    %2170 = vmatpush2.bf16.msra.mxu0 %v1539
    %2171 = vmatprep.subr.bf16.mxu0 %v1536
    %2172 = vmatpush2.bf16.msra.mxu0 %v1535
    %2173 = vmatprep.subr.bf16.mxu0 %v1532
    %2174 = vmatpush2.bf16.msra.mxu0 %v1531
    %2175 = vmatprep.subr.bf16.mxu0 %v1528
    %2176 = vmatpush2.bf16.msra.mxu0 %v1527
    %2177 = vmatprep.subr.bf16.mxu0 %v1524
    %2178 = vmatpush2.bf16.msra.mxu0 %v1523
    %2179 = vmatprep.subr.bf16.mxu0 %v1520
    %2180 = vmatpush2.bf16.msra.mxu0 %v1519
    %2181 = vmatprep.subr.bf16.mxu0 %v1516
    %2182 = vmatpush2.bf16.msra.mxu0 %v1515
    %2183 = vmatprep.subr.bf16.mxu0 %v1512
    %2184 = vmatpush2.bf16.msra.mxu0 %v1511
    %2185 = vmatprep.mubr.bf16.mxu0 %v424
    %2186 = vmatmul.mubr.bf16.gmra.mxu0 %v423
    %v2187 = vpop.f32.mrf.mxu0
    %v2188 = vadd.f32 %v700, %v2187
    %v2189 = vpop.f32.mrf.mxu0
    %v2190 = vadd.f32 %v704, %v2189
    %v2191 = vpop.f32.mrf.mxu0
    %v2192 = vpop.f32.mrf.mxu0
    %2193 = vdwg.mxu0
    %2194 = vmatprep.subr.bf16.mxu0 %v1572
    %2195 = vmatpush1.bf16.msra.mxu0 %v1571
    %2196 = vmatprep.subr.bf16.mxu0 %v1568
    %2197 = vmatpush1.bf16.msra.mxu0 %v1567
    %2198 = vmatprep.subr.bf16.mxu0 %v1564
    %2199 = vmatpush1.bf16.msra.mxu0 %v1563
    %2200 = vmatprep.subr.bf16.mxu0 %v1560
    %2201 = vmatpush1.bf16.msra.mxu0 %v1559
    %2202 = vmatprep.subr.bf16.mxu0 %v1556
    %2203 = vmatpush1.bf16.msra.mxu0 %v1555
    %2204 = vmatprep.subr.bf16.mxu0 %v1552
    %2205 = vmatpush1.bf16.msra.mxu0 %v1551
    %2206 = vmatprep.subr.bf16.mxu0 %v1548
    %2207 = vmatpush1.bf16.msra.mxu0 %v1547
    %2208 = vmatprep.subr.bf16.mxu0 %v1544
    %2209 = vmatpush1.bf16.msra.mxu0 %v1543
    %2210 = vmatprep.subr.bf16.mxu0 %v1604
    %2211 = vmatpush2.bf16.msra.mxu0 %v1603
    %2212 = vmatprep.subr.bf16.mxu0 %v1600
    %2213 = vmatpush2.bf16.msra.mxu0 %v1599
    %2214 = vmatprep.subr.bf16.mxu0 %v1596
    %2215 = vmatpush2.bf16.msra.mxu0 %v1595
    %2216 = vmatprep.subr.bf16.mxu0 %v1592
    %2217 = vmatpush2.bf16.msra.mxu0 %v1591
    %2218 = vmatprep.subr.bf16.mxu0 %v1588
    %2219 = vmatpush2.bf16.msra.mxu0 %v1587
    %2220 = vmatprep.subr.bf16.mxu0 %v1584
    %2221 = vmatpush2.bf16.msra.mxu0 %v1583
    %2222 = vmatprep.subr.bf16.mxu0 %v1580
    %2223 = vmatpush2.bf16.msra.mxu0 %v1579
    %2224 = vmatprep.subr.bf16.mxu0 %v1576
    %2225 = vmatpush2.bf16.msra.mxu0 %v1575
    %2226 = vmatprep.mubr.bf16.mxu0 %v426
    %2227 = vmatmul.mubr.bf16.gmra.mxu0 %v425
    %v2228 = vpop.f32.mrf.mxu0
    %v2229 = vadd.f32 %v2188, %v2228
    %v2230 = vpop.f32.mrf.mxu0
    %v2231 = vadd.f32 %v2190, %v2230
    %v2232 = vpop.f32.mrf.mxu0
    %v2233 = vpop.f32.mrf.mxu0
    %2234 = vdwg.mxu0
    %2235 = vmatprep.subr.bf16.mxu0 %v1636
    %2236 = vmatpush1.bf16.msra.mxu0 %v1635
    %2237 = vmatprep.subr.bf16.mxu0 %v1632
    %2238 = vmatpush1.bf16.msra.mxu0 %v1631
    %2239 = vmatprep.subr.bf16.mxu0 %v1628
    %2240 = vmatpush1.bf16.msra.mxu0 %v1627
    %2241 = vmatprep.subr.bf16.mxu0 %v1624
    %2242 = vmatpush1.bf16.msra.mxu0 %v1623
    %2243 = vmatprep.subr.bf16.mxu0 %v1620
    %2244 = vmatpush1.bf16.msra.mxu0 %v1619
    %2245 = vmatprep.subr.bf16.mxu0 %v1616
    %2246 = vmatpush1.bf16.msra.mxu0 %v1615
    %2247 = vmatprep.subr.bf16.mxu0 %v1612
    %2248 = vmatpush1.bf16.msra.mxu0 %v1611
    %2249 = vmatprep.subr.bf16.mxu0 %v1608
    %2250 = vmatpush1.bf16.msra.mxu0 %v1607
    %2251 = vmatprep.subr.bf16.mxu0 %v1668
    %2252 = vmatpush2.bf16.msra.mxu0 %v1667
    %2253 = vmatprep.subr.bf16.mxu0 %v1664
    %2254 = vmatpush2.bf16.msra.mxu0 %v1663
    %2255 = vmatprep.subr.bf16.mxu0 %v1660
    %2256 = vmatpush2.bf16.msra.mxu0 %v1659
    %2257 = vmatprep.subr.bf16.mxu0 %v1656
    %2258 = vmatpush2.bf16.msra.mxu0 %v1655
    %2259 = vmatprep.subr.bf16.mxu0 %v1652
    %2260 = vmatpush2.bf16.msra.mxu0 %v1651
    %2261 = vmatprep.subr.bf16.mxu0 %v1648
    %2262 = vmatpush2.bf16.msra.mxu0 %v1647
    %2263 = vmatprep.subr.bf16.mxu0 %v1644
    %2264 = vmatpush2.bf16.msra.mxu0 %v1643
    %2265 = vmatprep.subr.bf16.mxu0 %v1640
    %2266 = vmatpush2.bf16.msra.mxu0 %v1639
    %2267 = vmatprep.mubr.bf16.mxu0 %v428
    %2268 = vmatmul.mubr.bf16.gmra.mxu0 %v427
    %v2269 = vpop.f32.mrf.mxu0
    %v2270 = vadd.f32 %v2229, %v2269
    %v2271 = vpop.f32.mrf.mxu0
    %v2272 = vadd.f32 %v2231, %v2271
    %v2273 = vpop.f32.mrf.mxu0
    %v2274 = vpop.f32.mrf.mxu0
    %2275 = vdwg.mxu0
    %2276 = vmatprep.subr.bf16.mxu0 %v1700
    %2277 = vmatpush1.bf16.msra.mxu0 %v1699
    %2278 = vmatprep.subr.bf16.mxu0 %v1696
    %2279 = vmatpush1.bf16.msra.mxu0 %v1695
    %2280 = vmatprep.subr.bf16.mxu0 %v1692
    %2281 = vmatpush1.bf16.msra.mxu0 %v1691
    %2282 = vmatprep.subr.bf16.mxu0 %v1688
    %2283 = vmatpush1.bf16.msra.mxu0 %v1687
    %2284 = vmatprep.subr.bf16.mxu0 %v1684
    %2285 = vmatpush1.bf16.msra.mxu0 %v1683
    %2286 = vmatprep.subr.bf16.mxu0 %v1680
    %2287 = vmatpush1.bf16.msra.mxu0 %v1679
    %2288 = vmatprep.subr.bf16.mxu0 %v1676
    %2289 = vmatpush1.bf16.msra.mxu0 %v1675
    %2290 = vmatprep.subr.bf16.mxu0 %v1672
    %2291 = vmatpush1.bf16.msra.mxu0 %v1671
    %2292 = vmatprep.subr.bf16.mxu0 %v1732
    %2293 = vmatpush2.bf16.msra.mxu0 %v1731
    %2294 = vmatprep.subr.bf16.mxu0 %v1728
    %2295 = vmatpush2.bf16.msra.mxu0 %v1727
    %2296 = vmatprep.subr.bf16.mxu0 %v1724
    %2297 = vmatpush2.bf16.msra.mxu0 %v1723
    %2298 = vmatprep.subr.bf16.mxu0 %v1720
    %2299 = vmatpush2.bf16.msra.mxu0 %v1719
    %2300 = vmatprep.subr.bf16.mxu0 %v1716
    %2301 = vmatpush2.bf16.msra.mxu0 %v1715
    %2302 = vmatprep.subr.bf16.mxu0 %v1712
    %2303 = vmatpush2.bf16.msra.mxu0 %v1711
    %2304 = vmatprep.subr.bf16.mxu0 %v1708
    %2305 = vmatpush2.bf16.msra.mxu0 %v1707
    %2306 = vmatprep.subr.bf16.mxu0 %v1704
    %2307 = vmatpush2.bf16.msra.mxu0 %v1703
    %2308 = vmatprep.mubr.bf16.mxu0 %v430
    %2309 = vmatmul.mubr.bf16.gmra.mxu0 %v429
    %v2310 = vpop.f32.mrf.mxu0
    %v2311 = vadd.f32 %v2270, %v2310
    %v2312 = vpop.f32.mrf.mxu0
    %v2313 = vadd.f32 %v2272, %v2312
    %v2314 = vpop.f32.mrf.mxu0
    %v2315 = vpop.f32.mrf.mxu0
    %2316 = vdwg.mxu0
    %v2317 = vmax.f32 %v2147, 0.0
    %v2318 = vmax.f32 %v2149, 0.0
    %v2319 = vmax.f32 %v2311, 0.0
    %v2320 = vmax.f32 %v2313, 0.0
    %2321 = vst [vmem:[#allocation5] sm:$0xff] %v2317
    %2322 = vst [vmem:[#allocation5 + $0x8] sm:$0xff] %v2318
    %2323 = vst [vmem:[#allocation5 + $0x10] sm:$0xff] %v2319
    %2324 = vst [vmem:[#allocation5 + $0x18] sm:$0xff] %v2320
    // Predicated region
    $region34: #{mlp_forward.1} parent=1 // pred_check
      _
    $region35: #{mlp_forward.1} parent=1 // pred_check_branch
      %2326 = sbr.rel (0) target = $region37
    $region36: #{mlp_forward.1} parent=1 // pred_region
      %s2328 = ssub.s32 512, 512
      %2329 = vsyncadd [#allocation4], %s2328
      %s2331 = sshll.u32 [#allocation5], 4
      %s2332 = int_to_ptr.vmem [resolvable:$true] %s2331
      %2334 = dma.vmem_to_hbm [thread:$0]  %s2332, 512, %s7, [#allocation4]
    $region37: #{mlp_forward.1} parent=1 // pred_fallthru
      _
    // Predicated region
    $region38: #{mlp_forward.1} parent=1 // pred_check
      _
    $region39: #{mlp_forward.1} parent=1 // pred_check_branch
      %2336 = sbr.rel (0) target = $region41
    $region40: #{mlp_forward.1} parent=1 // pred_region
      %2337 = dma.done [#allocation4], 512
    $region41: #{mlp_forward.1} parent=1 // pred_fallthru
      _
    %2338 = vsyncpa [#allocation3], 1
    %2339 = vsyncpa [#allocation4], 1

</llo_original>
